<compile_context>
chip_gen: v5e
topology: v5e:2x2
jax: 0.10.0
libtpu: 0.0.40
codegen_flags: <defaults>
</compile_context>

<pallas_src>
import math
import functools

import numpy as np
import jax
import jax.numpy as jnp
from jax import lax
from jax.experimental import pallas as pl
from jax.experimental.pallas import tpu as pltpu

_NORM_EPS = 1e-12   # torch.nn.functional.normalize eps
_GAMMA = 2.0        # hard-coded `gamma` in the reference forward


# --------------------------------------------------------------------------
# Pass 1: tiled cosine matmul + per-row margin targets + hard-example count
# --------------------------------------------------------------------------
def _pass1_kernel(scal_ref,                      # SMEM (8,) f32 margin scalars
                  x_ref, wt_ref, wlab_ref,       # (TM,E) f32, (E,TN) bf16, (TM,E) bf16
                  logits_ref, ftl_ref, ftl2_ref, rowcnt_ref,   # outputs
                  xn_sc):                        # VMEM scratch (TM,E) bf16
    j = pl.program_id(1)

    # Per-row work once per B-tile (j == 0): normalize x, gather-based target,
    # final_target_logit / final_target_logit_, reset the hard-count rows.
    @pl.when(j == 0)
    def _():
        x = x_ref[...].astype(jnp.float32)
        ssq = jnp.sum(x * x, axis=-1, keepdims=True)
        # 1/max(||x||, eps) == min(rsqrt(||x||^2), 1/eps)  (EUP, eps-safe)
        inv = jnp.minimum(lax.rsqrt(ssq), 1.0 / _NORM_EPS)
        xn_sc[...] = (x * inv).astype(jnp.bfloat16)

        # target_logit[i] = <xn[i], wn[label[i]]>  (bf16 inputs, f32 accumulate
        # -> matches the MXU logits path), clamped like the matmul output.
        xnf = xn_sc[...].astype(jnp.float32)
        wl = wlab_ref[...].astype(jnp.float32)
        tgt = jnp.clip(jnp.sum(xnf * wl, axis=-1, keepdims=True), -1.0, 1.0)

        cos_m = scal_ref[0]
        sin_m = scal_ref[1]
        theta = scal_ref[2]
        sinmm = scal_ref[3]
        cos_m_ = scal_ref[4]
        sin_m_ = scal_ref[5]
        sinmm_ = scal_ref[6]

        sin_t = jnp.sqrt(jnp.maximum(1.0 - tgt * tgt, 0.0))
        cos_theta_m = tgt * cos_m - sin_t * sin_m
        cos_theta_m_ = tgt * cos_m_ - sin_t * sin_m_
        ftl_ref[...] = jnp.where(tgt > theta, cos_theta_m, tgt - sinmm)
        ftl2_ref[...] = jnp.where(tgt <= cos_m_, cos_theta_m_, tgt + sinmm_)
        rowcnt_ref[...] = jnp.zeros_like(rowcnt_ref)

    # bf16 MXU matmul (f32 accumulation) against the lane-dense [E, TN] RHS.
    logits = lax.dot_general(xn_sc[...], wt_ref[...],
                             (((1,), (0,)), ((), ())),
                             preferred_element_type=jnp.float32)
    logits = jnp.clip(logits, -1.0, 1.0)
    logits_ref[...] = logits   # f32 so pass-2 masks match the count exactly

    # hard-example count, accumulated per row across the C ("arbitrary") axis.
    rowcnt_ref[...] += jnp.sum((logits > ftl_ref[...]).astype(jnp.float32),
                               axis=-1, keepdims=True)


# --------------------------------------------------------------------------
# Pass 2: purely elementwise masked rescale (needs the global noise_scale)
# --------------------------------------------------------------------------
def _pass2_kernel(scal_ref,                      # SMEM (4,) f32: [noise_scale, t+1, s, 0]
                  labels_ref, logits_ref, ftl_ref, ftl2_ref,
                  out_ref):
    j = pl.program_id(1)
    noise_scale = scal_ref[0]
    t_plus_1 = scal_ref[1]
    s = scal_ref[2]

    logits = logits_ref[...]
    ftl = ftl_ref[...]
    ftl2 = ftl2_ref[...]
    labels = labels_ref[...]

    mask_hard = logits > ftl
    mask_noise = logits > ftl2
    # Same rewrite order as the PyTorch code (noise overwrites hard; both use
    # the ORIGINAL logits values; label column is overwritten last).
    result = jnp.where(mask_hard, logits * t_plus_1, logits)
    result = jnp.where(mask_noise, jnp.maximum(logits * noise_scale, 1e-30), result)

    tn = logits.shape[1]
    col = lax.broadcasted_iota(jnp.int32, logits.shape, 1) + j * tn
    onehot = (col == labels) & (labels >= 0)
    result = jnp.where(onehot, ftl, result)
    out_ref[...] = result * s


# --------------------------------------------------------------------------
# Wrapper
# --------------------------------------------------------------------------
def xy_loss_forward(x, labels, weight, *, s, m2, m3, t, errsum,
                    m_smooth=0.0, margin_ada=True, num_all=2900.0,
                    block_m=128, block_n=512):
    """Functional equivalent of XYLoss.forward (interclass_filtering_threshold=0).

    Returns (scaled_logits [B, C] f32, updated m_smooth scalar f32).
    m_smooth may be a traced scalar — no recompilation across steps.
    """
    x = x.astype(jnp.float32)
    weight = weight.astype(jnp.float32)
    B, E = x.shape
    C, E2 = weight.shape
    assert E == E2

    block_m = min(block_m, B)
    block_n = min(block_n, C)
    assert B % block_m == 0 and C % block_n == 0, "B/C must be divisible by tiles"
    assert block_m == B or block_m % 8 == 0
    assert block_n == C or block_n % 128 == 0
    nbi, nbj = B // block_m, C // block_n

    # --- runtime scalar margin constants (SMEM input -> no per-step recompile) ---
    clear_rio = 1.0 - float(errsum)
    m_smooth = jnp.asarray(m_smooth, jnp.float32)
    if margin_ada:
        m3_ada = (1.0 - m_smooth / clear_rio) * m3
    else:
        m3_ada = jnp.float32(m3)
    cos_m_ = jnp.cos(m3_ada)
    sin_m_ = jnp.sin(m3_ada)
    sinmm_ = jnp.sin(-m3_ada) * m3_ada
    scal1 = jnp.stack([jnp.float32(math.cos(m2)),
                       jnp.float32(math.sin(m2)),
                       jnp.float32(math.cos(math.pi - m2)),
                       jnp.float32(math.sin(math.pi - m2) * m2),
                       cos_m_.astype(jnp.float32),
                       sin_m_.astype(jnp.float32),
                       sinmm_.astype(jnp.float32),
                       jnp.float32(0.0)])

    # --- one-off weight prep (amortized over the whole batch):
    #     normalize, transpose to lane-dense [E, C] bf16 RHS, gather label rows ---
    wsq = jnp.sum(weight * weight, axis=-1, keepdims=True)
    wn = weight * jnp.minimum(lax.rsqrt(wsq), 1.0 / _NORM_EPS)
    wt_bf16 = wn.T.astype(jnp.bfloat16)                                   # [E, C]
    labels = labels.astype(jnp.int32)
    wlab_bf16 = jnp.take(wn, jnp.maximum(labels, 0), axis=0).astype(jnp.bfloat16)
    labels2d = labels.reshape(B, 1)

    cparams1 = pltpu.CompilerParams(
        dimension_semantics=("parallel", "arbitrary"),
        vmem_limit_bytes=48 * 1024 * 1024)
    cparams2 = pltpu.CompilerParams(
        dimension_semantics=("parallel", "parallel"),
        vmem_limit_bytes=48 * 1024 * 1024)

    # --- pass 1: tiled cosine logits + per-row targets + hard count ---
    logits, ftl, ftl2, rowcnt = pl.pallas_call(
        _pass1_kernel,
        grid=(nbi, nbj),
        in_specs=[
            pl.BlockSpec(memory_space=pltpu.MemorySpace.SMEM),            # scalars
            pl.BlockSpec((block_m, E), lambda i, j: (i, 0)),              # x
            pl.BlockSpec((E, block_n), lambda i, j: (0, j)),              # wn.T (bf16)
            pl.BlockSpec((block_m, E), lambda i, j: (i, 0)),              # wn[labels]
        ],
        out_specs=(
            pl.BlockSpec((block_m, block_n), lambda i, j: (i, j)),        # logits
            pl.BlockSpec((block_m, 1), lambda i, j: (i, 0)),              # ftl
            pl.BlockSpec((block_m, 1), lambda i, j: (i, 0)),              # ftl_
            pl.BlockSpec((block_m, 1), lambda i, j: (i, 0)),              # row hard cnt
        ),
        out_shape=(jax.ShapeDtypeStruct((B, C), jnp.float32),
                   jax.ShapeDtypeStruct((B, 1), jnp.float32),
                   jax.ShapeDtypeStruct((B, 1), jnp.float32),
                   jax.ShapeDtypeStruct((B, 1), jnp.float32)),
        scratch_shapes=[pltpu.VMEM((block_m, E), jnp.bfloat16)],
        compiler_params=cparams1,
    )(scal1, x, wt_bf16, wlab_bf16)

    # --- global reduction -> adaptive m_smooth / noise_scale (tiny scalar ops) ---
    hard_count = jnp.sum(rowcnt)
    easy_num = num_all - hard_count
    m_smooth_new = (easy_num / num_all) * 0.01 + (1.0 - 0.01) * m_smooth
    noise_scale = (1.0 - m_smooth_new / clear_rio) ** _GAMMA
    scal2 = jnp.stack([noise_scale.astype(jnp.float32),
                       jnp.float32(t + 1.0),
                       jnp.float32(s),
                       jnp.float32(0.0)])

    # --- pass 2: elementwise masked rescale, lane-dense tiles ---
    out = pl.pallas_call(
        _pass2_kernel,
        grid=(nbi, nbj),
        in_specs=[
            pl.BlockSpec(memory_space=pltpu.MemorySpace.SMEM),            # scalars
            pl.BlockSpec((block_m, 1), lambda i, j: (i, 0)),              # labels
            pl.BlockSpec((block_m, block_n), lambda i, j: (i, j)),        # logits
            pl.BlockSpec((block_m, 1), lambda i, j: (i, 0)),              # ftl
            pl.BlockSpec((block_m, 1), lambda i, j: (i, 0)),              # ftl_
        ],
        out_specs=pl.BlockSpec((block_m, block_n), lambda i, j: (i, j)),
        out_shape=jax.ShapeDtypeStruct((B, C), jnp.float32),
        compiler_params=cparams2,
    )(scal2, labels2d, logits, ftl, ftl2)

    return out, m_smooth_new


# --------------------------------------------------------------------------
# Pure-JAX reference (mirrors the PyTorch forward; fp16 autocast ~ bf16 matmul)
# --------------------------------------------------------------------------
def xy_loss_reference(x, labels, weight, *, s, m2, m3, t, errsum,
                      m_smooth=0.0, num_all=2900.0):
    cos_m, sin_m = math.cos(m2), math.sin(m2)
    theta, sinmm = math.cos(math.pi - m2), math.sin(math.pi - m2) * m2
    clear_rio = 1.0 - errsum
    m3 = (1.0 - m_smooth / clear_rio) * m3
    cos_m_, sin_m_ = math.cos(m3), math.sin(m3)
    sinmm_ = math.sin(-m3) * m3

    xn = x / jnp.maximum(jnp.linalg.norm(x, axis=-1, keepdims=True), _NORM_EPS)
    wn = weight / jnp.maximum(jnp.linalg.norm(weight, axis=-1, keepdims=True), _NORM_EPS)
    logits = jnp.dot(xn.astype(jnp.bfloat16), wn.astype(jnp.bfloat16).T,
                     preferred_element_type=jnp.float32)
    logits = jnp.clip(logits, -1.0, 1.0)

    target = jnp.take_along_axis(logits, labels[:, None], axis=1)
    sin_theta = jnp.sqrt(jnp.maximum(1.0 - target ** 2, 0.0))
    cos_theta_m = target * cos_m - sin_theta * sin_m
    cos_theta_m_ = target * cos_m_ - sin_theta * sin_m_
    ftl = jnp.where(target > theta, cos_theta_m, target - sinmm)
    ftl_ = jnp.where(target <= cos_m_, cos_theta_m_, target + sinmm_)

    mask_hard = logits > ftl
    mask_noise = logits > ftl_
    hard_count = jnp.sum(mask_hard.astype(jnp.float32))
    m_smooth_new = ((num_all - hard_count) / num_all) * 0.01 + 0.99 * m_smooth
    noise_scale = (1.0 - m_smooth_new / clear_rio) ** _GAMMA

    result = logits
    result = jnp.where(mask_hard, logits * (t + 1.0), result)
    result = jnp.where(mask_noise, jnp.maximum(logits * noise_scale, 1e-30), result)
    onehot = jax.nn.one_hot(labels, logits.shape[1], dtype=jnp.bool_)
    result = jnp.where(onehot, ftl, result)
    return result * s, m_smooth_new


if __name__ == "__main__":
    # Small shapes consistent with the module: embeddings [B, E], num_class C.
    B, E, C = 32, 128, 512
    s, m2, m3, t, errsum = 64.0, 0.5, 0.2, 0.3, 0.1

    key = jax.random.PRNGKey(0)
    kx, kw, kl = jax.random.split(key, 3)
    x = jax.random.normal(kx, (B, E), dtype=jnp.float32)
    # weight_activated ~ Normal(0, 0.01), shape (num_class, embedding_size)
    weight = 0.01 * jax.random.normal(kw, (C, E), dtype=jnp.float32)
    # all labels valid (labels != -1), as required by the reference broadcast
    labels = jax.random.randint(kl, (B,), 0, C, dtype=jnp.int32)

    run = jax.jit(functools.partial(
        xy_loss_forward, s=s, m2=m2, m3=m3, t=t, errsum=errsum,
        block_m=16, block_n=128))   # grid (2, 4) — exercises both grid axes

    # --- step 1 (m_smooth = 0, as at module init) ---
    out1, ms1 = run(x, labels, weight, m_smooth=jnp.float32(0.0))
    jax.block_until_ready((out1, ms1))
    ref1, ref_ms1 = xy_loss_reference(
        x, labels, weight, s=s, m2=m2, m3=m3, t=t, errsum=errsum, m_smooth=0.0)
    np.testing.assert_allclose(np.asarray(out1), np.asarray(ref1),
                               rtol=2e-2, atol=2e-2)
    np.testing.assert_allclose(float(ms1), float(ref_ms1), rtol=1e-4, atol=1e-5)

    # --- step 2: feed the updated m_smooth back (runtime scalar -> no recompile) ---
    out2, ms2 = run(x, labels, weight, m_smooth=ms1)
    jax.block_until_ready((out2, ms2))
    ref2, ref_ms2 = xy_loss_reference(
        x, labels, weight, s=s, m2=m2, m3=m3, t=t, errsum=errsum,
        m_smooth=float(ref_ms1))
    np.testing.assert_allclose(np.asarray(out2), np.asarray(ref2),
                               rtol=2e-2, atol=2e-2)
    np.testing.assert_allclose(float(ms2), float(ref_ms2), rtol=1e-4, atol=1e-4)

    print("KERNEL_OK")
</pallas_src>

<mosaic_0001>
module attributes {stable_mosaic.version = 11 : i64} {
  func.func @_pass1_kernel(%arg0: i32, %arg1: i32, %arg2: memref<8xf32, #tpu.memory_space<smem>>, %arg3: memref<16x128xf32, #tpu.memory_space<vmem>>, %arg4: memref<128x128xbf16, #tpu.memory_space<vmem>>, %arg5: memref<16x128xbf16, #tpu.memory_space<vmem>>, %arg6: memref<16x128xf32, #tpu.memory_space<vmem>>, %arg7: memref<16x1xf32, #tpu.memory_space<vmem>>, %arg8: memref<16x1xf32, #tpu.memory_space<vmem>>, %arg9: memref<16x1xf32, #tpu.memory_space<vmem>>, %arg10: memref<16x128xbf16, #tpu.memory_space<vmem>>) attributes {dimension_semantics = [#tpu.dimension_semantics<parallel>, #tpu.dimension_semantics<arbitrary>], iteration_bounds = array<i64: 2, 4>, scalar_prefetch = 0 : i64, scratch_operands = 1 : i64, tpu.core_type = #tpu.core_type<tc>, window_params = [{transform_indices = @transform_0, window_bounds = array<i64: 8>}, {transform_indices = @transform_1, window_bounds = array<i64: 16, 128>}, {transform_indices = @transform_2, window_bounds = array<i64: 128, 128>}, {transform_indices = @transform_3, window_bounds = array<i64: 16, 128>}, {transform_indices = @transform_4, window_bounds = array<i64: 16, 128>}, {transform_indices = @transform_5, window_bounds = array<i64: 16, 1>}, {transform_indices = @transform_6, window_bounds = array<i64: 16, 1>}, {transform_indices = @transform_7, window_bounds = array<i64: 16, 1>}]} {
    %c0_i32 = arith.constant 0 : i32
    %0 = arith.cmpi eq, %arg1, %c0_i32 : i32
    %1 = arith.extui %0 : i1 to i32
    %c0_i32_0 = arith.constant 0 : i32
    %2 = arith.cmpi ne, %1, %c0_i32_0 : i32
    scf.if %2 {
      %c0_15 = arith.constant 0 : index
      %c0_16 = arith.constant 0 : index
      %21 = vector.load %arg3[%c0_15, %c0_16] : memref<16x128xf32, #tpu.memory_space<vmem>>, vector<16x128xf32>
      %22 = arith.mulf %21, %21 : vector<16x128xf32>
      %cst_17 = arith.constant dense<0.000000e+00> : vector<16xf32>
      %23 = vector.multi_reduction <add>, %22, %cst_17 [1] : vector<16x128xf32> to vector<16xf32>
      %24 = vector.shape_cast %23 : vector<16xf32> to vector<16x1xf32>
      %25 = math.rsqrt %24 : vector<16x1xf32>
      %cst_18 = arith.constant 9.99999995E+11 : f32
      %26 = vector.broadcast %cst_18 : f32 to vector<16x1xf32>
      %27 = arith.minimumf %25, %26 : vector<16x1xf32>
      %28 = vector.broadcast %27 : vector<16x1xf32> to vector<16x128xf32>
      %29 = arith.mulf %21, %28 : vector<16x128xf32>
      %30 = arith.truncf %29 : vector<16x128xf32> to vector<16x128xbf16>
      %c0_19 = arith.constant 0 : index
      %c0_20 = arith.constant 0 : index
      %31 = vector.load %arg10[%c0_19, %c0_20] : memref<16x128xbf16, #tpu.memory_space<vmem>>, vector<16x128xbf16>
      tpu.vector_store %arg10[%c0_19, %c0_20], %30 {strides = array<i32>} : memref<16x128xbf16, #tpu.memory_space<vmem>>, vector<16x128xbf16>,
      %c0_21 = arith.constant 0 : index
      %c0_22 = arith.constant 0 : index
      %32 = vector.load %arg10[%c0_21, %c0_22] : memref<16x128xbf16, #tpu.memory_space<vmem>>, vector<16x128xbf16>
      %33 = arith.extf %32 : vector<16x128xbf16> to vector<16x128xf32>
      %c0_23 = arith.constant 0 : index
      %c0_24 = arith.constant 0 : index
      %34 = vector.load %arg5[%c0_23, %c0_24] : memref<16x128xbf16, #tpu.memory_space<vmem>>, vector<16x128xbf16>
      %35 = arith.extf %34 : vector<16x128xbf16> to vector<16x128xf32>
      %36 = arith.mulf %33, %35 : vector<16x128xf32>
      %cst_25 = arith.constant dense<0.000000e+00> : vector<16xf32>
      %37 = vector.multi_reduction <add>, %36, %cst_25 [1] : vector<16x128xf32> to vector<16xf32>
      %38 = vector.shape_cast %37 : vector<16xf32> to vector<16x1xf32>
      %cst_26 = arith.constant -1.000000e+00 : f32
      %cst_27 = arith.constant 1.000000e+00 : f32
      %39 = vector.broadcast %cst_26 : f32 to vector<16x1xf32>
      %40 = arith.maximumf %39, %38 : vector<16x1xf32>
      %41 = vector.broadcast %cst_27 : f32 to vector<16x1xf32>
      %42 = arith.minimumf %41, %40 : vector<16x1xf32>
      %c0_28 = arith.constant 0 : index
      %43 = memref.load %arg2[%c0_28] : memref<8xf32, #tpu.memory_space<smem>>
      %c1 = arith.constant 1 : index
      %44 = memref.load %arg2[%c1] : memref<8xf32, #tpu.memory_space<smem>>
      %c2 = arith.constant 2 : index
      %45 = memref.load %arg2[%c2] : memref<8xf32, #tpu.memory_space<smem>>
      %c3 = arith.constant 3 : index
      %46 = memref.load %arg2[%c3] : memref<8xf32, #tpu.memory_space<smem>>
      %c4 = arith.constant 4 : index
      %47 = memref.load %arg2[%c4] : memref<8xf32, #tpu.memory_space<smem>>
      %c5 = arith.constant 5 : index
      %48 = memref.load %arg2[%c5] : memref<8xf32, #tpu.memory_space<smem>>
      %c6 = arith.constant 6 : index
      %49 = memref.load %arg2[%c6] : memref<8xf32, #tpu.memory_space<smem>>
      %50 = arith.mulf %42, %42 : vector<16x1xf32>
      %cst_29 = arith.constant 1.000000e+00 : f32
      %51 = vector.broadcast %cst_29 : f32 to vector<16x1xf32>
      %52 = arith.subf %51, %50 : vector<16x1xf32>
      %cst_30 = arith.constant 0.000000e+00 : f32
      %53 = vector.broadcast %cst_30 : f32 to vector<16x1xf32>
      %54 = arith.maximumf %52, %53 : vector<16x1xf32>
      %55 = math.sqrt %54 : vector<16x1xf32>
      %56 = vector.broadcast %43 : f32 to vector<16x1xf32>
      %57 = arith.mulf %42, %56 : vector<16x1xf32>
      %58 = vector.broadcast %44 : f32 to vector<16x1xf32>
      %59 = arith.mulf %55, %58 : vector<16x1xf32>
      %60 = arith.subf %57, %59 : vector<16x1xf32>
      %61 = vector.broadcast %47 : f32 to vector<16x1xf32>
      %62 = arith.mulf %42, %61 : vector<16x1xf32>
      %63 = vector.broadcast %48 : f32 to vector<16x1xf32>
      %64 = arith.mulf %55, %63 : vector<16x1xf32>
      %65 = arith.subf %62, %64 : vector<16x1xf32>
      %66 = vector.broadcast %45 : f32 to vector<16x1xf32>
      %67 = arith.cmpf ogt, %42, %66 : vector<16x1xf32>
      %68 = vector.broadcast %46 : f32 to vector<16x1xf32>
      %69 = arith.subf %42, %68 : vector<16x1xf32>
      %70 = arith.select %67, %60, %69 : vector<16x1xi1>, vector<16x1xf32>
      %c0_31 = arith.constant 0 : index
      %c0_32 = arith.constant 0 : index
      %71 = vector.load %arg7[%c0_31, %c0_32] : memref<16x1xf32, #tpu.memory_space<vmem>>, vector<16x1xf32>
      tpu.vector_store %arg7[%c0_31, %c0_32], %70 {strides = array<i32>} : memref<16x1xf32, #tpu.memory_space<vmem>>, vector<16x1xf32>,
      %72 = vector.broadcast %47 : f32 to vector<16x1xf32>
      %73 = arith.cmpf ole, %42, %72 : vector<16x1xf32>
      %74 = vector.broadcast %49 : f32 to vector<16x1xf32>
      %75 = arith.addf %42, %74 : vector<16x1xf32>
      %76 = arith.select %73, %65, %75 : vector<16x1xi1>, vector<16x1xf32>
      %c0_33 = arith.constant 0 : index
      %c0_34 = arith.constant 0 : index
      %77 = vector.load %arg8[%c0_33, %c0_34] : memref<16x1xf32, #tpu.memory_space<vmem>>, vector<16x1xf32>
      tpu.vector_store %arg8[%c0_33, %c0_34], %76 {strides = array<i32>} : memref<16x1xf32, #tpu.memory_space<vmem>>, vector<16x1xf32>,
      %cst_35 = arith.constant 0.000000e+00 : f32
      %78 = vector.broadcast %cst_35 : f32 to vector<16x1xf32>
      %c0_36 = arith.constant 0 : index
      %c0_37 = arith.constant 0 : index
      %79 = vector.load %arg9[%c0_36, %c0_37] : memref<16x1xf32, #tpu.memory_space<vmem>>, vector<16x1xf32>
      tpu.vector_store %arg9[%c0_36, %c0_37], %78 {strides = array<i32>} : memref<16x1xf32, #tpu.memory_space<vmem>>, vector<16x1xf32>,
    } else {
    }
    %c0 = arith.constant 0 : index
    %c0_1 = arith.constant 0 : index
    %3 = vector.load %arg10[%c0, %c0_1] : memref<16x128xbf16, #tpu.memory_space<vmem>>, vector<16x128xbf16>
    %c0_2 = arith.constant 0 : index
    %c0_3 = arith.constant 0 : index
    %4 = vector.load %arg4[%c0_2, %c0_3] : memref<128x128xbf16, #tpu.memory_space<vmem>>, vector<128x128xbf16>
    %cst = arith.constant dense<0.000000e+00> : vector<16x128xf32>
    %5 = tpu.matmul %3, %4, %cst {dimension_numbers = #tpu.dot_dimension_numbers<[1], [0], [0], [1], [0, 0, 1, 1], [], []>} : vector<16x128xbf16>, vector<128x128xbf16>, vector<16x128xf32> -> vector<16x128xf32>
    %cst_4 = arith.constant -1.000000e+00 : f32
    %cst_5 = arith.constant 1.000000e+00 : f32
    %6 = vector.broadcast %cst_4 : f32 to vector<16x128xf32>
    %7 = arith.maximumf %6, %5 : vector<16x128xf32>
    %8 = vector.broadcast %cst_5 : f32 to vector<16x128xf32>
    %9 = arith.minimumf %8, %7 : vector<16x128xf32>
    %c0_6 = arith.constant 0 : index
    %c0_7 = arith.constant 0 : index
    %10 = vector.load %arg6[%c0_6, %c0_7] : memref<16x128xf32, #tpu.memory_space<vmem>>, vector<16x128xf32>
    tpu.vector_store %arg6[%c0_6, %c0_7], %9 {strides = array<i32>} : memref<16x128xf32, #tpu.memory_space<vmem>>, vector<16x128xf32>,
    %c0_8 = arith.constant 0 : index
    %c0_9 = arith.constant 0 : index
    %11 = vector.load %arg9[%c0_8, %c0_9] : memref<16x1xf32, #tpu.memory_space<vmem>>, vector<16x1xf32>
    %c0_10 = arith.constant 0 : index
    %c0_11 = arith.constant 0 : index
    %12 = vector.load %arg7[%c0_10, %c0_11] : memref<16x1xf32, #tpu.memory_space<vmem>>, vector<16x1xf32>
    %13 = vector.broadcast %12 : vector<16x1xf32> to vector<16x128xf32>
    %14 = arith.cmpf ogt, %9, %13 : vector<16x128xf32>
    %15 = arith.extui %14 : vector<16x128xi1> to vector<16x128xi32>
    %16 = arith.sitofp %15 : vector<16x128xi32> to vector<16x128xf32>
    %cst_12 = arith.constant dense<0.000000e+00> : vector<16xf32>
    %17 = vector.multi_reduction <add>, %16, %cst_12 [1] : vector<16x128xf32> to vector<16xf32>
    %18 = vector.shape_cast %17 : vector<16xf32> to vector<16x1xf32>
    %19 = arith.addf %11, %18 : vector<16x1xf32>
    %c0_13 = arith.constant 0 : index
    %c0_14 = arith.constant 0 : index
    %20 = vector.load %arg9[%c0_13, %c0_14] : memref<16x1xf32, #tpu.memory_space<vmem>>, vector<16x1xf32>
    tpu.vector_store %arg9[%c0_13, %c0_14], %19 {strides = array<i32>} : memref<16x1xf32, #tpu.memory_space<vmem>>, vector<16x1xf32>,
    return
  }
  func.func @transform_0(%arg0: i32, %arg1: i32) -> i32 {
    %c0_i32 = arith.constant 0 : i32
    %c0_i32_0 = arith.constant 0 : i32
    return %c0_i32 : i32
  }
  func.func @transform_1(%arg0: i32, %arg1: i32) -> (i32, i32) {
    %c0_i32 = arith.constant 0 : i32
    %c0_i32_0 = arith.constant 0 : i32
    return %arg0, %c0_i32 : i32, i32
  }
  func.func @transform_2(%arg0: i32, %arg1: i32) -> (i32, i32) {
    %c0_i32 = arith.constant 0 : i32
    %c0_i32_0 = arith.constant 0 : i32
    return %c0_i32, %arg1 : i32, i32
  }
  func.func @transform_3(%arg0: i32, %arg1: i32) -> (i32, i32) {
    %c0_i32 = arith.constant 0 : i32
    %c0_i32_0 = arith.constant 0 : i32
    return %arg0, %c0_i32 : i32, i32
  }
  func.func @transform_4(%arg0: i32, %arg1: i32) -> (i32, i32) {
    %c0_i32 = arith.constant 0 : i32
    return %arg0, %arg1 : i32, i32
  }
  func.func @transform_5(%arg0: i32, %arg1: i32) -> (i32, i32) {
    %c0_i32 = arith.constant 0 : i32
    %c0_i32_0 = arith.constant 0 : i32
    return %arg0, %c0_i32 : i32, i32
  }
  func.func @transform_6(%arg0: i32, %arg1: i32) -> (i32, i32) {
    %c0_i32 = arith.constant 0 : i32
    %c0_i32_0 = arith.constant 0 : i32
    return %arg0, %c0_i32 : i32, i32
  }
  func.func @transform_7(%arg0: i32, %arg1: i32) -> (i32, i32) {
    %c0_i32 = arith.constant 0 : i32
    %c0_i32_0 = arith.constant 0 : i32
    return %arg0, %c0_i32 : i32, i32
  }
}

module attributes {stable_mosaic.version = 11 : i64} {
  func.func @_pass2_kernel(%arg0: i32, %arg1: i32, %arg2: memref<4xf32, #tpu.memory_space<smem>>, %arg3: memref<16x1xi32, #tpu.memory_space<vmem>>, %arg4: memref<16x128xf32, #tpu.memory_space<vmem>>, %arg5: memref<16x1xf32, #tpu.memory_space<vmem>>, %arg6: memref<16x1xf32, #tpu.memory_space<vmem>>, %arg7: memref<16x128xf32, #tpu.memory_space<vmem>>) attributes {dimension_semantics = [#tpu.dimension_semantics<parallel>, #tpu.dimension_semantics<parallel>], iteration_bounds = array<i64: 2, 4>, scalar_prefetch = 0 : i64, scratch_operands = 0 : i64, tpu.core_type = #tpu.core_type<tc>, window_params = [{transform_indices = @transform_0, window_bounds = array<i64: 4>}, {transform_indices = @transform_1, window_bounds = array<i64: 16, 1>}, {transform_indices = @transform_2, window_bounds = array<i64: 16, 128>}, {transform_indices = @transform_3, window_bounds = array<i64: 16, 1>}, {transform_indices = @transform_4, window_bounds = array<i64: 16, 1>}, {transform_indices = @transform_5, window_bounds = array<i64: 16, 128>}]} {
    %c0 = arith.constant 0 : index
    %0 = memref.load %arg2[%c0] : memref<4xf32, #tpu.memory_space<smem>>
    %c1 = arith.constant 1 : index
    %1 = memref.load %arg2[%c1] : memref<4xf32, #tpu.memory_space<smem>>
    %c2 = arith.constant 2 : index
    %2 = memref.load %arg2[%c2] : memref<4xf32, #tpu.memory_space<smem>>
    %c0_0 = arith.constant 0 : index
    %c0_1 = arith.constant 0 : index
    %3 = vector.load %arg4[%c0_0, %c0_1] : memref<16x128xf32, #tpu.memory_space<vmem>>, vector<16x128xf32>
    %c0_2 = arith.constant 0 : index
    %c0_3 = arith.constant 0 : index
    %4 = vector.load %arg5[%c0_2, %c0_3] : memref<16x1xf32, #tpu.memory_space<vmem>>, vector<16x1xf32>
    %c0_4 = arith.constant 0 : index
    %c0_5 = arith.constant 0 : index
    %5 = vector.load %arg6[%c0_4, %c0_5] : memref<16x1xf32, #tpu.memory_space<vmem>>, vector<16x1xf32>
    %c0_6 = arith.constant 0 : index
    %c0_7 = arith.constant 0 : index
    %6 = vector.load %arg3[%c0_6, %c0_7] : memref<16x1xi32, #tpu.memory_space<vmem>>, vector<16x1xi32>
    %7 = vector.broadcast %4 : vector<16x1xf32> to vector<16x128xf32>
    %8 = arith.cmpf ogt, %3, %7 : vector<16x128xf32>
    %9 = vector.broadcast %5 : vector<16x1xf32> to vector<16x128xf32>
    %10 = arith.cmpf ogt, %3, %9 : vector<16x128xf32>
    %11 = vector.broadcast %1 : f32 to vector<16x128xf32>
    %12 = arith.mulf %3, %11 : vector<16x128xf32>
    %13 = arith.select %8, %12, %3 : vector<16x128xi1>, vector<16x128xf32>
    %14 = vector.broadcast %0 : f32 to vector<16x128xf32>
    %15 = arith.mulf %3, %14 : vector<16x128xf32>
    %cst = arith.constant 1.000000e-30 : f32
    %16 = vector.broadcast %cst : f32 to vector<16x128xf32>
    %17 = arith.maximumf %15, %16 : vector<16x128xf32>
    %18 = arith.select %10, %17, %13 : vector<16x128xi1>, vector<16x128xf32>
    %19 = tpu.iota {dimensions = array<i32: 1>} : vector<16x128xi32>
    %c128_i32 = arith.constant 128 : i32
    %20 = arith.muli %arg1, %c128_i32 : i32
    %21 = vector.broadcast %20 : i32 to vector<16x128xi32>
    %22 = arith.addi %19, %21 : vector<16x128xi32>
    %23 = vector.broadcast %6 : vector<16x1xi32> to vector<16x128xi32>
    %24 = arith.cmpi eq, %22, %23 : vector<16x128xi32>
    %c0_i32 = arith.constant 0 : i32
    %25 = vector.broadcast %c0_i32 : i32 to vector<16x1xi32>
    %26 = arith.cmpi sge, %6, %25 : vector<16x1xi32>
    %27 = vector.broadcast %26 : vector<16x1xi1> to vector<16x128xi1>
    %28 = arith.andi %24, %27 : vector<16x128xi1>
    %29 = vector.shape_cast %4 : vector<16x1xf32> to vector<16x1xf32>
    %30 = vector.broadcast %29 : vector<16x1xf32> to vector<16x128xf32>
    %31 = arith.select %28, %30, %18 : vector<16x128xi1>, vector<16x128xf32>
    %32 = vector.broadcast %2 : f32 to vector<16x128xf32>
    %33 = arith.mulf %31, %32 : vector<16x128xf32>
    %c0_8 = arith.constant 0 : index
    %c0_9 = arith.constant 0 : index
    %34 = vector.load %arg7[%c0_8, %c0_9] : memref<16x128xf32, #tpu.memory_space<vmem>>, vector<16x128xf32>
    tpu.vector_store %arg7[%c0_8, %c0_9], %33 {strides = array<i32>} : memref<16x128xf32, #tpu.memory_space<vmem>>, vector<16x128xf32>,
    return
  }
  func.func @transform_0(%arg0: i32, %arg1: i32) -> i32 {
    %c0_i32 = arith.constant 0 : i32
    %c0_i32_0 = arith.constant 0 : i32
    return %c0_i32 : i32
  }
  func.func @transform_1(%arg0: i32, %arg1: i32) -> (i32, i32) {
    %c0_i32 = arith.constant 0 : i32
    %c0_i32_0 = arith.constant 0 : i32
    return %arg0, %c0_i32 : i32, i32
  }
  func.func @transform_2(%arg0: i32, %arg1: i32) -> (i32, i32) {
    %c0_i32 = arith.constant 0 : i32
    return %arg0, %arg1 : i32, i32
  }
  func.func @transform_3(%arg0: i32, %arg1: i32) -> (i32, i32) {
    %c0_i32 = arith.constant 0 : i32
    %c0_i32_0 = arith.constant 0 : i32
    return %arg0, %c0_i32 : i32, i32
  }
  func.func @transform_4(%arg0: i32, %arg1: i32) -> (i32, i32) {
    %c0_i32 = arith.constant 0 : i32
    %c0_i32_0 = arith.constant 0 : i32
    return %arg0, %c0_i32 : i32, i32
  }
  func.func @transform_5(%arg0: i32, %arg1: i32) -> (i32, i32) {
    %c0_i32 = arith.constant 0 : i32
    return %arg0, %arg1 : i32, i32
  }
}

</mosaic_0001>

<llo_original>
// kernel: xy_loss_forward.3
$region0: #{xy_loss_forward.3}
  #allocation0 [shape = 'u32[]', space=smem, size = 0x4, offset = 0x4, fixed_abs, tag = 'smem constant byte address 0x4 - core index']
  #allocation1 [shape = 'u32[72,128]{1,0:T(1,128)}', space=vmem, size = 0x9000, scoped, tag = 'internal scratch']
  %s0 = inlined_call_operand.vmem [shape: f32[4], index: 0, kind: input, shape index: {}]
  %s1 = inlined_call_operand.vmem [shape: s32[32,1], index: 1, kind: input, shape index: {}]
  %s2 = inlined_call_operand.vmem [shape: f32[32,512], index: 2, kind: input, shape index: {}]
  %s3 = inlined_call_operand.vmem [shape: f32[32,1], index: 3, kind: input, shape index: {}]
  %s4 = inlined_call_operand.vmem [shape: f32[32,1], index: 4, kind: input, shape index: {}]
  %s5 = inlined_call_operand.hbm [shape: f32[32,512], index: 5, kind: output, shape index: {}]
  %s6 = sld [smem:[#allocation0]]
  $region95: #{xy_loss_forward.3} parent=0
    _
  %s8 = ssub.s32 1, %s6
  %s9 = scalar_select 0, %s8, %s6
  $region1: #{xy_loss_forward.3} parent=0
    #allocation2 [shape = 'u8[512]{0}', space=smem, size = 0x200, scoped, tag = 'input window, operand 0, single buffered']
    #allocation3 [shape = 's32[2]{0}', space=sflag, size = 0x8, scoped, tag = 'scoped memory for xy_loss_forward.3']
    #allocation4 [shape = 's32[2]{0}', space=sflag, size = 0x8, scoped, tag = 'scoped memory for xy_loss_forward.3']
    #allocation5 [shape = 'u8[16384]{0}', space=vmem, size = 0x4000, scoped, tag = 'input window, operand 2']
    #allocation6 [shape = 'u8[16384]{0}', space=vmem, size = 0x4000, scoped, tag = 'output window, operand 0']
    %10 = vsyncpa [#allocation4], 0
    %11 = vsyncpa [#allocation3], 0
    %s12 = scalar_lea.sflag [#allocation3], 1
    %13 = vsyncpa %s12, 0
    loop: start=0, step=1, limit=10
    $region2: #{xy_loss_forward.3} parent=1 // loop_pre_header
      _
    $region3: #{xy_loss_forward.3} parent=1 // loop_header
      %s15 = sphi 0, %s19
      %p16 = scmp.ge.s32.totalorder %s15, 10
      %s22 = sphi 0, %s34
      %s23 = sphi 0, %s30
      %s24 = sphi 0, %s22
      %s25 = sphi 0, %s23
      %s26 = sphi 0, %s24
      %s27 = sphi 0, %s25
      %s35 = sphi 0, %s35
      %s37 = sphi 0, %s35
      %s38 = sphi 0, %s37
      %s52 = sphi 0, %s38
      %s58 = sphi 0, %s60
      %s61 = sphi 0, %s58
      %s62 = sphi 0, %s61
      %s78 = sphi 0, %s62
      %s86 = sphi 0, %s88
      %s89 = sphi 0, %s86
      %s90 = sphi 0, %s89
      %s106 = sphi 0, %s90
      %s112 = sphi 0, %s114
      %s115 = sphi 0, %s112
      %s116 = sphi 0, %s115
      %s132 = sphi 0, %s116
      %s138 = sphi 0, %s140
      %s141 = sphi 0, %s138
      %s142 = sphi 0, %s141
      %s158 = sphi 0, %s142
      %s166 = sphi 0, %s168
      %s169 = sphi 0, %s166
      %s170 = sphi 0, %s169
      %s186 = sphi 0, %s170
    $region4: #{xy_loss_forward.3} parent=1 // loop_header_branch
      %18 = sbr.rel (%p16) target = $region8
    $region5: #{xy_loss_forward.3} parent=1 // loop_body
      %s20 = ssub.s32 %s15, 1
      %s21 = ssub.s32 %s15, 2
      %s28 = sadd.s32 1, %s23
      %p29 = scmp.ge.s32.totalorder %s28, 4
      %s30 = scalar_select %p29, 0, %s28
      %s31 = sadd.s32 1, %s22
      %s32 = scalar_select %p29, %s31, %s22
      %p33 = scmp.ge.s32.totalorder %s32, 2
      %s34 = scalar_select %p33, 0, %s32
      %s36 = sadd.s32 %s35, 1
      %p39 = scmp.eq.s32.totalorder %s15, 7
      %p40 = scmp.ne.s32.totalorder %s35, %s37
      %p41 = scmp.eq.s32.totalorder %s15, 0
      %p42 = por %p40, %p41
      %p43 = scmp.ne.s32.totalorder %s35, %s37
      %p44 = scmp.eq.s32.totalorder %s20, 7
      %p45 = por %p43, %p44
      %p46 = scmp.ne.s32.totalorder %s37, %s38
      %p47 = scmp.eq.s32.totalorder %s20, 0
      %p48 = por %p46, %p47
      %p49 = scmp.ne.s32.totalorder %s37, %s38
      %p50 = scmp.eq.s32.totalorder %s21, 7
      %p51 = por %p49, %p50
      %p53 = scmp.ne.s32.totalorder %s38, %s52
      %p54 = scmp.eq.s32.totalorder %s21, 0
      %p55 = por %p53, %p54
      %s56 = ssub.s32 %s22, %s34
      %p57 = scmp.eq.s32.totalorder %s56, 0
      %s59 = sadd.s32 %s58, 1
      %s60 = scalar_select %p57, %s58, %s59
      %p63 = pneg %p57
      %p64 = scmp.eq.s32.totalorder %s15, 7
      %p65 = por %p63, %p64
      %p66 = scmp.ne.s32.totalorder %s58, %s61
      %p67 = scmp.eq.s32.totalorder %s15, 0
      %p68 = por %p66, %p67
      %p69 = scmp.ne.s32.totalorder %s58, %s61
      %p70 = scmp.eq.s32.totalorder %s20, 7
      %p71 = por %p69, %p70
      %p72 = scmp.ne.s32.totalorder %s61, %s62
      %p73 = scmp.eq.s32.totalorder %s20, 0
      %p74 = por %p72, %p73
      %p75 = scmp.ne.s32.totalorder %s61, %s62
      %p76 = scmp.eq.s32.totalorder %s21, 7
      %p77 = por %p75, %p76
      %p79 = scmp.ne.s32.totalorder %s62, %s78
      %p80 = scmp.eq.s32.totalorder %s21, 0
      %p81 = por %p79, %p80
      %s82 = ssub.s32 %s22, %s34
      %s83 = ssub.s32 %s23, %s30
      %s84 = sor.u32 %s82, %s83
      %p85 = scmp.eq.s32.totalorder %s84, 0
      %s87 = sadd.s32 %s86, 1
      %s88 = scalar_select %p85, %s86, %s87
      %p91 = pneg %p85
      %p92 = scmp.eq.s32.totalorder %s15, 7
      %p93 = por %p91, %p92
      %p94 = scmp.ne.s32.totalorder %s86, %s89
      %p95 = scmp.eq.s32.totalorder %s15, 0
      %p96 = por %p94, %p95
      %p97 = scmp.ne.s32.totalorder %s86, %s89
      %p98 = scmp.eq.s32.totalorder %s20, 7
      %p99 = por %p97, %p98
      %p100 = scmp.ne.s32.totalorder %s89, %s90
      %p101 = scmp.eq.s32.totalorder %s20, 0
      %p102 = por %p100, %p101
      %p103 = scmp.ne.s32.totalorder %s89, %s90
      %p104 = scmp.eq.s32.totalorder %s21, 7
      %p105 = por %p103, %p104
      %p107 = scmp.ne.s32.totalorder %s90, %s106
      %p108 = scmp.eq.s32.totalorder %s21, 0
      %p109 = por %p107, %p108
      %s110 = ssub.s32 %s22, %s34
      %p111 = scmp.eq.s32.totalorder %s110, 0
      %s113 = sadd.s32 %s112, 1
      %s114 = scalar_select %p111, %s112, %s113
      %p117 = pneg %p111
      %p118 = scmp.eq.s32.totalorder %s15, 7
      %p119 = por %p117, %p118
      %p120 = scmp.ne.s32.totalorder %s112, %s115
      %p121 = scmp.eq.s32.totalorder %s15, 0
      %p122 = por %p120, %p121
      %p123 = scmp.ne.s32.totalorder %s112, %s115
      %p124 = scmp.eq.s32.totalorder %s20, 7
      %p125 = por %p123, %p124
      %p126 = scmp.ne.s32.totalorder %s115, %s116
      %p127 = scmp.eq.s32.totalorder %s20, 0
      %p128 = por %p126, %p127
      %p129 = scmp.ne.s32.totalorder %s115, %s116
      %p130 = scmp.eq.s32.totalorder %s21, 7
      %p131 = por %p129, %p130
      %p133 = scmp.ne.s32.totalorder %s116, %s132
      %p134 = scmp.eq.s32.totalorder %s21, 0
      %p135 = por %p133, %p134
      %s136 = ssub.s32 %s22, %s34
      %p137 = scmp.eq.s32.totalorder %s136, 0
      %s139 = sadd.s32 %s138, 1
      %s140 = scalar_select %p137, %s138, %s139
      %p143 = pneg %p137
      %p144 = scmp.eq.s32.totalorder %s15, 7
      %p145 = por %p143, %p144
      %p146 = scmp.ne.s32.totalorder %s138, %s141
      %p147 = scmp.eq.s32.totalorder %s15, 0
      %p148 = por %p146, %p147
      %p149 = scmp.ne.s32.totalorder %s138, %s141
      %p150 = scmp.eq.s32.totalorder %s20, 7
      %p151 = por %p149, %p150
      %p152 = scmp.ne.s32.totalorder %s141, %s142
      %p153 = scmp.eq.s32.totalorder %s20, 0
      %p154 = por %p152, %p153
      %p155 = scmp.ne.s32.totalorder %s141, %s142
      %p156 = scmp.eq.s32.totalorder %s21, 7
      %p157 = por %p155, %p156
      %p159 = scmp.ne.s32.totalorder %s142, %s158
      %p160 = scmp.eq.s32.totalorder %s21, 0
      %p161 = por %p159, %p160
      %s162 = ssub.s32 %s22, %s34
      %s163 = ssub.s32 %s23, %s30
      %s164 = sor.u32 %s162, %s163
      %p165 = scmp.eq.s32.totalorder %s164, 0
      %s167 = sadd.s32 %s166, 1
      %s168 = scalar_select %p165, %s166, %s167
      %p171 = pneg %p165
      %p172 = scmp.eq.s32.totalorder %s15, 7
      %p173 = por %p171, %p172
      %p174 = scmp.ne.s32.totalorder %s166, %s169
      %p175 = scmp.eq.s32.totalorder %s15, 0
      %p176 = por %p174, %p175
      %p177 = scmp.ne.s32.totalorder %s166, %s169
      %p178 = scmp.eq.s32.totalorder %s20, 7
      %p179 = por %p177, %p178
      %p180 = scmp.ne.s32.totalorder %s169, %s170
      %p181 = scmp.eq.s32.totalorder %s20, 0
      %p182 = por %p180, %p181
      %p183 = scmp.ne.s32.totalorder %s169, %s170
      %p184 = scmp.eq.s32.totalorder %s21, 7
      %p185 = por %p183, %p184
      %p187 = scmp.ne.s32.totalorder %s170, %s186
      %p188 = scmp.eq.s32.totalorder %s21, 0
      %p189 = por %p187, %p188
      %p190 = scmp.le.s32.totalorder 1, %s15
      %p191 = scmp.lt.s32.totalorder %s15, 9
      %p192 = pnand %p190, %p191
      %p193 = pneg %p192
      // Predicated region
      $region9: #{xy_loss_forward.3} parent=5 // pred_check
        _
      $region10: #{xy_loss_forward.3} parent=5 // pred_check_branch
        %195 = sbr.rel (%p192) target = $region12
      $region11: #{xy_loss_forward.3} parent=5 // pred_region
        %s196 = ssub.s32 %s15, 1
        // Predicated region
        $region13: #{xy_loss_forward.3} parent=11 // pred_check
          %p197 = pneg %p48
        $region14: #{xy_loss_forward.3} parent=11 // pred_check_branch
          %199 = sbr.rel (%p197) target = $region16
        $region15: #{xy_loss_forward.3} parent=11 // pred_region
          %201 = vsyncadd [#allocation4], 0
          %s203 = sshll.u32 %s0, 4
          %s204 = int_to_ptr.vmem [resolvable:$true] %s203
          %206 = dma.vmem_to_smem %s204, 16, [#allocation2], [#allocation4]
        $region16: #{xy_loss_forward.3} parent=11 // pred_fallthru
          _
      $region12: #{xy_loss_forward.3} parent=5 // pred_fallthru
        _
      %p207 = scmp.lt.s32.totalorder %s15, 8
      // Predicated region
      $region17: #{xy_loss_forward.3} parent=5 // pred_check
        %p208 = pneg %p207
      $region18: #{xy_loss_forward.3} parent=5 // pred_check_branch
        %210 = sbr.rel (%p208) target = $region20
      $region19: #{xy_loss_forward.3} parent=5 // pred_region
        // Predicated region
        $region21: #{xy_loss_forward.3} parent=19 // pred_check
          %p211 = pneg %p68
        $region22: #{xy_loss_forward.3} parent=19 // pred_check_branch
          %213 = sbr.rel (%p211) target = $region24
        $region23: #{xy_loss_forward.3} parent=19 // pred_region
          %s214 = smul.u32 2, %s22
          %p215 = scmp.lt.s32.totalorder %s214, 3
          %s216 = scalar_select %p215, %s214, 3
          %s217 = smul.addr %s216, 8
          %s218 = scalar_lea.vmem %s1, %s217
          %s219 = smul.u32 2, %s22
        $region24: #{xy_loss_forward.3} parent=19 // pred_fallthru
          _
        // Predicated region
        $region25: #{xy_loss_forward.3} parent=19 // pred_check
          %p220 = pneg %p96
        $region26: #{xy_loss_forward.3} parent=19 // pred_check_branch
          %222 = sbr.rel (%p220) target = $region28
        $region27: #{xy_loss_forward.3} parent=19 // pred_region
          %s223 = sand.u32 %s86, 1
          %s224 = sand.u32 %s86, 1
          %s225 = smul.addr %s224, 16
          %s226 = scalar_lea.vmem [#allocation5], %s225
          %s227 = smul.u32 2, %s22
          %s228 = smul.addr %s227, 4
          %s229 = sadd.s32 %s23, %s228
          %s230 = smul.addr %s229, 8
          %s231 = scalar_lea.vmem %s2, %s230
          // Predicated region
          $region29: #{xy_loss_forward.3} parent=27 // pred_check
            _
          $region30: #{xy_loss_forward.3} parent=27 // pred_check_branch
            %233 = sbr.rel (0) target = $region32
          $region31: #{xy_loss_forward.3} parent=27 // pred_region
            // Predicated region
            $region33: #{xy_loss_forward.3} parent=31 // pred_check
              _
            $region34: #{xy_loss_forward.3} parent=31 // pred_check_branch
              %235 = sbr.rel (0) target = $region36
            $region35: #{xy_loss_forward.3} parent=31 // pred_region
              // Predicated region
              $region48: #{xy_loss_forward.3} parent=35 // pred_check
                _
              $region49: #{xy_loss_forward.3} parent=35 // pred_check_branch
                %253 = sbr.rel (0) target = $region51
              $region50: #{xy_loss_forward.3} parent=35 // pred_region
                loop: start=0, step=1, limit=1
                $region52: #{xy_loss_forward.3} parent=50 // loop_pre_header
                  _
                $region53: #{xy_loss_forward.3} parent=50 // loop_header
                  %s255 = sphi 0, %s259
                  %p256 = scmp.ge.s32.totalorder %s255, 1
                  %s260 = sphi %s231, %s231
                  %s261 = sphi %s226, %s226
                $region54: #{xy_loss_forward.3} parent=50 // loop_header_branch
                  %258 = sbr.rel (%p256) target = $region58
                $region55: #{xy_loss_forward.3} parent=50 // loop_body
                  %v262 = vld [vmem:[%s260] sm:$0xff]
                  %263 = vst [vmem:[%s261] sm:$0xff] %v262
                  %v264 = vld [vmem:[%s260 + $0x20] sm:$0xff]
                  %265 = vst [vmem:[%s261 + $0x8] sm:$0xff] %v264
                $region56: #{xy_loss_forward.3} parent=50 // loop_footer
                  %s259 = sadd.s32 1, %s255
                $region57: #{xy_loss_forward.3} parent=50 // loop_footer_branch
                  %254 = sbr.rel target = $region53
                $region58: #{xy_loss_forward.3} parent=50 // loop_exit
                  _
              $region51: #{xy_loss_forward.3} parent=35 // pred_fallthru
                _
              // Predicated region
              $region59: #{xy_loss_forward.3} parent=35 // pred_check
                _
              $region60: #{xy_loss_forward.3} parent=35 // pred_check_branch
                %267 = sbr.rel target = $region62
              $region61: #{xy_loss_forward.3} parent=35 // pred_region
                _
              $region62: #{xy_loss_forward.3} parent=35 // pred_fallthru
                _
            $region36: #{xy_loss_forward.3} parent=31 // pred_fallthru
              _
            // Predicated region
            $region37: #{xy_loss_forward.3} parent=31 // pred_check
              _
            $region38: #{xy_loss_forward.3} parent=31 // pred_check_branch
              %237 = sbr.rel target = $region40
            $region39: #{xy_loss_forward.3} parent=31 // pred_region
              %s239 = ssub.s32 256, 1
              loop: start=0, step=1, limit=1
              $region41: #{xy_loss_forward.3} parent=39 // loop_pre_header
                _
              $region42: #{xy_loss_forward.3} parent=39 // loop_header
                %s241 = sphi 0, %s245
                %p242 = scmp.ge.s32.totalorder %s241, 1
                %s246 = sphi %s231, %s231
                %s247 = sphi %s226, %s226
              $region43: #{xy_loss_forward.3} parent=39 // loop_header_branch
                %244 = sbr.rel (%p242) target = $region47
              $region44: #{xy_loss_forward.3} parent=39 // loop_body
                %v248 = vld [vmem:[%s246] sm:%s239]
                %249 = vst [vmem:[%s247] sm:%s239] %v248
                %v250 = vld [vmem:[%s246 + $0x20] sm:%s239]
                %251 = vst [vmem:[%s247 + $0x8] sm:%s239] %v250
              $region45: #{xy_loss_forward.3} parent=39 // loop_footer
                %s245 = sadd.s32 1, %s241
              $region46: #{xy_loss_forward.3} parent=39 // loop_footer_branch
                %240 = sbr.rel target = $region42
              $region47: #{xy_loss_forward.3} parent=39 // loop_exit
                _
            $region40: #{xy_loss_forward.3} parent=31 // pred_fallthru
              _
          $region32: #{xy_loss_forward.3} parent=27 // pred_fallthru
            _
          %268 = vnop
        $region28: #{xy_loss_forward.3} parent=19 // pred_fallthru
          _
        // Predicated region
        $region63: #{xy_loss_forward.3} parent=19 // pred_check
          %p269 = pneg %p122
        $region64: #{xy_loss_forward.3} parent=19 // pred_check_branch
          %271 = sbr.rel (%p269) target = $region66
        $region65: #{xy_loss_forward.3} parent=19 // pred_region
          %s272 = smul.u32 2, %s22
          %p273 = scmp.lt.s32.totalorder %s272, 3
          %s274 = scalar_select %p273, %s272, 3
          %s275 = smul.addr %s274, 8
          %s276 = scalar_lea.vmem %s3, %s275
          %s277 = smul.u32 2, %s22
        $region66: #{xy_loss_forward.3} parent=19 // pred_fallthru
          _
        // Predicated region
        $region67: #{xy_loss_forward.3} parent=19 // pred_check
          %p278 = pneg %p148
        $region68: #{xy_loss_forward.3} parent=19 // pred_check_branch
          %280 = sbr.rel (%p278) target = $region70
        $region69: #{xy_loss_forward.3} parent=19 // pred_region
          %s281 = smul.u32 2, %s22
          %p282 = scmp.lt.s32.totalorder %s281, 3
          %s283 = scalar_select %p282, %s281, 3
          %s284 = smul.addr %s283, 8
          %s285 = scalar_lea.vmem %s4, %s284
          %s286 = smul.u32 2, %s22
        $region70: #{xy_loss_forward.3} parent=19 // pred_fallthru
          _
      $region20: #{xy_loss_forward.3} parent=5 // pred_fallthru
        _
      %p287 = scmp.le.s32.totalorder 1, %s15
      %p288 = scmp.lt.s32.totalorder %s15, 9
      %p289 = pnand %p287, %p288
      %p290 = pneg %p289
      // Predicated region
      $region71: #{xy_loss_forward.3} parent=5 // pred_check
        _
      $region72: #{xy_loss_forward.3} parent=5 // pred_check_branch
        %292 = sbr.rel (%p289) target = $region74
      $region73: #{xy_loss_forward.3} parent=5 // pred_region
        %s293 = ssub.s32 %s15, 1
        // Predicated region
        $region75: #{xy_loss_forward.3} parent=73 // pred_check
          %p294 = pneg %p48
        $region76: #{xy_loss_forward.3} parent=73 // pred_check_branch
          %296 = sbr.rel (%p294) target = $region78
        $region77: #{xy_loss_forward.3} parent=73 // pred_region
          %298 = dma.done [#allocation4], 16
        $region78: #{xy_loss_forward.3} parent=73 // pred_fallthru
          _
        %s299 = sand.u32 %s89, 1
        %s300 = sand.u32 %s89, 1
        %s301 = smul.addr %s300, 16
        %s302 = scalar_lea.vmem [#allocation5], %s301
        // Predicated region
        $region79: #{xy_loss_forward.3} parent=73 // pred_check
          %p303 = pneg %p102
        $region80: #{xy_loss_forward.3} parent=73 // pred_check_branch
          %305 = sbr.rel (%p303) target = $region82
        $region81: #{xy_loss_forward.3} parent=73 // pred_region
          _
        $region82: #{xy_loss_forward.3} parent=73 // pred_fallthru
          _
        %306 = sfence
        %p307 = pneg %p48
        %p308 = pneg %p45
        %s309 = smul.u32 2, %s24
        %p310 = scmp.lt.s32.totalorder %s309, 3
        %s311 = scalar_select %p310, %s309, 3
        %s312 = smul.addr %s311, 8
        %s313 = scalar_lea.vmem %s1, %s312
        %p314 = pneg %p74
        %p315 = pneg %p71
        %s316 = sand.u32 %s89, 1
        %s317 = sand.u32 %s89, 1
        %s318 = smul.addr %s317, 16
        %s319 = scalar_lea.vmem [#allocation5], %s318
        %p320 = pneg %p102
        %p321 = pneg %p99
        %s322 = smul.u32 2, %s24
        %p323 = scmp.lt.s32.totalorder %s322, 3
        %s324 = scalar_select %p323, %s322, 3
        %s325 = smul.addr %s324, 8
        %s326 = scalar_lea.vmem %s3, %s325
        %p327 = pneg %p128
        %p328 = pneg %p125
        %s329 = smul.u32 2, %s24
        %p330 = scmp.lt.s32.totalorder %s329, 3
        %s331 = scalar_select %p330, %s329, 3
        %s332 = smul.addr %s331, 8
        %s333 = scalar_lea.vmem %s4, %s332
        %p334 = pneg %p154
        %p335 = pneg %p151
        %p336 = pneg %p182
        %p337 = pneg %p179
        %s338 = sand.u32 %s169, 1
        %s339 = scalar_lea.sflag [#allocation3], %s338
        %s340 = sand.u32 %s169, 1
        %s341 = smul.addr %s340, 16
        %s342 = scalar_lea.vmem [#allocation6], %s341
        %s343 = smul.u32 2, %s24
        %p344 = scmp.lt.s32.totalorder %s343, 3
        %s345 = scalar_select %p344, %s343, 3
        %s346 = smul.addr %s345, 8
        %s347 = scalar_lea.vmem %s1, %s346
        %s348 = smul.u32 2, %s24
        %s349 = smul.u32 2, %s24
        %s350 = smul.u32 2, %s24
        %p351 = scmp.lt.s32.totalorder %s350, 3
        %s352 = scalar_select %p351, %s350, 3
        %s353 = smul.addr %s352, 8
        %s354 = scalar_lea.vmem %s3, %s353
        %s355 = smul.u32 2, %s24
        %s356 = smul.u32 2, %s24
        %p357 = scmp.lt.s32.totalorder %s356, 3
        %s358 = scalar_select %p357, %s356, 3
        %s359 = smul.addr %s358, 8
        %s360 = scalar_lea.vmem %s4, %s359
        %s361 = smul.u32 2, %s24
        %s362 = smul.u32 2, %s24
        %s363 = sld [smem:[#allocation2]]
        %s364 = sld [smem:[#allocation2 + $0x1]]
        %s365 = sld [smem:[#allocation2 + $0x2]]
        %v366 = vld [vmem:[%s302] sm:$0xff]
        %v367 = vld [vmem:[%s302 + $0x8] sm:$0xff]
        %v368 = vld [vmem:[%s354] sm:$0xff]
        %v369 = vld [vmem:[%s354 + $0x8] sm:$0xff]
        %v370 = vld [vmem:[%s360] sm:$0xff]
        %v371 = vld [vmem:[%s360 + $0x8] sm:$0xff]
        %v372 = vld [vmem:[%s347] sm:$0xff]
        %v373 = vld [vmem:[%s347 + $0x8] sm:$0xff]
        %375 = vset.pattern.permute.xlu0 0
        %376 = vperm.xlu0 %375, %v368
        %v377 = vpop.permute.xlu0 %376
        %380 = vset.pattern.permute.xlu0 0
        %381 = vperm.xlu0 %380, %v369
        %v382 = vpop.permute.xlu0 %381
        %vm384 = vcmp.gt.f32.partialorder %v366, %v377
        %vm385 = vcmp.gt.f32.partialorder %v367, %v382
        %387 = vset.pattern.permute.xlu0 0
        %388 = vperm.xlu0 %387, %v370
        %v389 = vpop.permute.xlu0 %388
        %392 = vset.pattern.permute.xlu0 0
        %393 = vperm.xlu0 %392, %v371
        %v394 = vpop.permute.xlu0 %393
        %vm396 = vcmp.gt.f32.partialorder %v366, %v389
        %vm397 = vcmp.gt.f32.partialorder %v367, %v394
        %v398 = vstv %s364
        %v399 = vmul.f32 %v366, %v398
        %v400 = vmul.f32 %v367, %v398
        %v401 = vsel %vm384, %v399, %v366
        %v402 = vsel %vm385, %v400, %v367
        %v403 = vstv %s363
        %v404 = vmul.f32 %v366, %v403
        %v405 = vmul.f32 %v367, %v403
        %v406 = vmax.f32 %v404, 1e-30
        %v407 = vmax.f32 %v405, 1e-30
        %v408 = vsel %vm396, %v406, %v401
        %v409 = vsel %vm397, %v407, %v402
        %v410 = vlaneseq
        %v411 = vand.u32 %v410, 127
        %s412 = smul.u32 %s25, 128
        %v413 = vstv %s412
        %v414 = vadd.s32 %v411, %v413
        %415 = vset.pattern.permute.xlu0 0
        %416 = vperm.xlu0 %415, %v372
        %v417 = vpop.permute.xlu0 %416
        %418 = vset.pattern.permute.xlu0 0
        %419 = vperm.xlu0 %418, %v373
        %v420 = vpop.permute.xlu0 %419
        %vm421 = vcmp.eq.s32.totalorder %v414, %v417
        %vm422 = vcmp.eq.s32.totalorder %v414, %v420
        %vm423 = vcmp.ge.s32.totalorder %v372, 0
        %vm424 = vcmp.ge.s32.totalorder %v373, 0
        %v425 = vsel %vm423, 1, 0
        %v426 = vsel %vm424, 1, 0
        %427 = vset.pattern.permute.xlu0 0
        %428 = vperm.xlu0 %427, %v425
        %v429 = vpop.permute.xlu0 %428
        %430 = vset.pattern.permute.xlu0 0
        %431 = vperm.xlu0 %430, %v426
        %v432 = vpop.permute.xlu0 %431
        %vm433 = vcmp.eq.s32.totalorder %v429, 1
        %vm434 = vcmp.eq.s32.totalorder %v432, 1
        %vm435 = vmand %vm421, %vm433
        %vm436 = vmand %vm422, %vm434
        %v437 = vsel %vm435, %v377, %v408
        %v438 = vsel %vm436, %v382, %v409
        %v439 = vstv %s365
        %v440 = vmul.f32 %v437, %v439
        %v441 = vmul.f32 %v438, %v439
        %442 = vst [vmem:[%s342] sm:$0xff] %v440
        %443 = vst [vmem:[%s342 + $0x8] sm:$0xff] %v441
        %s444 = sand.u32 %s169, 1
        %s445 = scalar_lea.sflag [#allocation3], %s444
        %s446 = sand.u32 %s169, 1
        %s447 = smul.addr %s446, 16
        %s448 = scalar_lea.vmem [#allocation6], %s447
        // Predicated region
        $region83: #{xy_loss_forward.3} parent=73 // pred_check
          %p449 = pneg %p179
        $region84: #{xy_loss_forward.3} parent=73 // pred_check_branch
          %451 = sbr.rel (%p449) target = $region86
        $region85: #{xy_loss_forward.3} parent=73 // pred_region
          %s452 = smul.u32 2, %s24
          %454 = vsyncadd %s445, 0
          %s455 = smul.addr %s452, 4
          %s456 = sadd.s32 %s25, %s455
          %s457 = smul.addr %s456, 8
          %s458 = scalar_lea.hbm %s5, %s457
          %s459 = sshll.u32 %s448, 4
          %s460 = int_to_ptr.vmem [resolvable:$true] %s459
          %s461 = sshll.u32 %s458, 4
          %s462 = int_to_ptr.hbm [resolvable:$true] %s461
          %467 = dma.vmem_to_hbm [thread:$0]  %s460, 256, %s462, %s445, 128, 512, 8
        $region86: #{xy_loss_forward.3} parent=73 // pred_fallthru
          _
      $region74: #{xy_loss_forward.3} parent=5 // pred_fallthru
        _
      %p468 = scmp.le.s32.totalorder 2, %s15
      // Predicated region
      $region87: #{xy_loss_forward.3} parent=5 // pred_check
        %p469 = pneg %p468
      $region88: #{xy_loss_forward.3} parent=5 // pred_check_branch
        %471 = sbr.rel (%p469) target = $region90
      $region89: #{xy_loss_forward.3} parent=5 // pred_region
        %s472 = ssub.s32 %s15, 2
        // Predicated region
        $region91: #{xy_loss_forward.3} parent=89 // pred_check
          %p473 = pneg %p185
        $region92: #{xy_loss_forward.3} parent=89 // pred_check_branch
          %475 = sbr.rel (%p473) target = $region94
        $region93: #{xy_loss_forward.3} parent=89 // pred_region
          %s476 = sand.u32 %s170, 1
          %s477 = scalar_lea.sflag [#allocation3], %s476
          %s478 = sand.u32 %s170, 1
          %s479 = smul.addr %s478, 16
          %s480 = scalar_lea.vmem [#allocation6], %s479
          %482 = dma.done %s477, 256
        $region94: #{xy_loss_forward.3} parent=89 // pred_fallthru
          _
      $region90: #{xy_loss_forward.3} parent=5 // pred_fallthru
        _
    $region6: #{xy_loss_forward.3} parent=1 // loop_footer
      %s19 = sadd.s32 1, %s15
    $region7: #{xy_loss_forward.3} parent=1 // loop_footer_branch
      %14 = sbr.rel target = $region3
    $region8: #{xy_loss_forward.3} parent=1 // loop_exit
      _
    %483 = vsyncpa [#allocation3], 1
    %s484 = scalar_lea.sflag [#allocation3], 1
    %485 = vsyncpa %s484, 1
    %486 = vsyncpa [#allocation4], 1
    %s487 = scalar_lea.sflag [#allocation4], 1
    %488 = vsyncpa %s487, 1

// kernel: xy_loss_forward.2
$region0: #{xy_loss_forward.2}
  #allocation0 [shape = 'u32[]', space=smem, size = 0x4, offset = 0x4, fixed_abs, tag = 'smem constant byte address 0x4 - core index']
  #allocation1 [shape = 'u32[72,128]{1,0:T(1,128)}', space=vmem, size = 0x9000, scoped, tag = 'internal scratch']
  #allocation2 [shape = 'bf16[16,128]{1,0:T(8,128)(2,1)}', space=vmem, size = 0x1000, scoped, tag = 'scratch operand']
  %s0 = inlined_call_operand.vmem [shape: f32[8], index: 0, kind: input, shape index: {}]
  %s1 = inlined_call_operand.vmem [shape: f32[32,128], index: 1, kind: input, shape index: {}]
  %s2 = inlined_call_operand.vmem [shape: bf16[128,512], index: 2, kind: input, shape index: {}]
  %s3 = inlined_call_operand.vmem [shape: bf16[32,128], index: 3, kind: input, shape index: {}]
  %s4 = inlined_call_operand.vmem [shape: f32[32,512], index: 4, kind: output, shape index: {0}]
  %s5 = inlined_call_operand.vmem [shape: f32[32,1], index: 5, kind: output, shape index: {1}]
  %s6 = inlined_call_operand.vmem [shape: f32[32,1], index: 6, kind: output, shape index: {2}]
  %s7 = inlined_call_operand.vmem [shape: f32[32,1], index: 7, kind: output, shape index: {3}]
  %8 = xla_tuple %s4, %s5, %s6, %s7
  %s9 = sld [smem:[#allocation0]]
  $region156: #{xy_loss_forward.2} parent=0
    _
  %s11 = ssub.s32 1, %s9
  %s12 = scalar_select 0, %s11, %s9
  $region1: #{xy_loss_forward.2} parent=0
    #allocation3 [shape = 'u8[512]{0}', space=smem, size = 0x200, scoped, tag = 'input window, operand 0, single buffered']
    #allocation4 [shape = 's32[2]{0}', space=sflag, size = 0x8, scoped, tag = 'scoped memory for xy_loss_forward.2']
    #allocation5 [shape = 'u8[65536]{0}', space=vmem, size = 0x10000, scoped, tag = 'input window, operand 2']
    #allocation6 [shape = 'u8[16384]{0}', space=vmem, size = 0x4000, scoped, tag = 'output window, operand 0']
    %13 = vsyncpa [#allocation4], 0
    loop: start=0, step=1, limit=10
    $region2: #{xy_loss_forward.2} parent=1 // loop_pre_header
      _
    $region3: #{xy_loss_forward.2} parent=1 // loop_header
      %s15 = sphi 0, %s19
      %p16 = scmp.ge.s32.totalorder %s15, 10
      %s22 = sphi 0, %s34
      %s23 = sphi 0, %s30
      %s24 = sphi 0, %s22
      %s25 = sphi 0, %s23
      %s26 = sphi 0, %s24
      %s27 = sphi 0, %s25
      %s35 = sphi 0, %s35
      %s37 = sphi 0, %s35
      %s38 = sphi 0, %s37
      %s52 = sphi 0, %s38
      %s58 = sphi 0, %s60
      %s61 = sphi 0, %s58
      %s62 = sphi 0, %s61
      %s78 = sphi 0, %s62
      %s84 = sphi 0, %s86
      %s87 = sphi 0, %s84
      %s88 = sphi 0, %s87
      %s104 = sphi 0, %s88
      %s110 = sphi 0, %s112
      %s113 = sphi 0, %s110
      %s114 = sphi 0, %s113
      %s130 = sphi 0, %s114
      %s138 = sphi 0, %s140
      %s141 = sphi 0, %s138
      %s142 = sphi 0, %s141
      %s158 = sphi 0, %s142
      %s164 = sphi 0, %s166
      %s167 = sphi 0, %s164
      %s168 = sphi 0, %s167
      %s184 = sphi 0, %s168
      %s190 = sphi 0, %s192
      %s193 = sphi 0, %s190
      %s194 = sphi 0, %s193
      %s210 = sphi 0, %s194
      %s216 = sphi 0, %s218
      %s219 = sphi 0, %s216
      %s220 = sphi 0, %s219
      %s236 = sphi 0, %s220
    $region4: #{xy_loss_forward.2} parent=1 // loop_header_branch
      %18 = sbr.rel (%p16) target = $region8
    $region5: #{xy_loss_forward.2} parent=1 // loop_body
      %s20 = ssub.s32 %s15, 1
      %s21 = ssub.s32 %s15, 2
      %s28 = sadd.s32 1, %s23
      %p29 = scmp.ge.s32.totalorder %s28, 4
      %s30 = scalar_select %p29, 0, %s28
      %s31 = sadd.s32 1, %s22
      %s32 = scalar_select %p29, %s31, %s22
      %p33 = scmp.ge.s32.totalorder %s32, 2
      %s34 = scalar_select %p33, 0, %s32
      %s36 = sadd.s32 %s35, 1
      %p39 = scmp.eq.s32.totalorder %s15, 7
      %p40 = scmp.ne.s32.totalorder %s35, %s37
      %p41 = scmp.eq.s32.totalorder %s15, 0
      %p42 = por %p40, %p41
      %p43 = scmp.ne.s32.totalorder %s35, %s37
      %p44 = scmp.eq.s32.totalorder %s20, 7
      %p45 = por %p43, %p44
      %p46 = scmp.ne.s32.totalorder %s37, %s38
      %p47 = scmp.eq.s32.totalorder %s20, 0
      %p48 = por %p46, %p47
      %p49 = scmp.ne.s32.totalorder %s37, %s38
      %p50 = scmp.eq.s32.totalorder %s21, 7
      %p51 = por %p49, %p50
      %p53 = scmp.ne.s32.totalorder %s38, %s52
      %p54 = scmp.eq.s32.totalorder %s21, 0
      %p55 = por %p53, %p54
      %s56 = ssub.s32 %s22, %s34
      %p57 = scmp.eq.s32.totalorder %s56, 0
      %s59 = sadd.s32 %s58, 1
      %s60 = scalar_select %p57, %s58, %s59
      %p63 = pneg %p57
      %p64 = scmp.eq.s32.totalorder %s15, 7
      %p65 = por %p63, %p64
      %p66 = scmp.ne.s32.totalorder %s58, %s61
      %p67 = scmp.eq.s32.totalorder %s15, 0
      %p68 = por %p66, %p67
      %p69 = scmp.ne.s32.totalorder %s58, %s61
      %p70 = scmp.eq.s32.totalorder %s20, 7
      %p71 = por %p69, %p70
      %p72 = scmp.ne.s32.totalorder %s61, %s62
      %p73 = scmp.eq.s32.totalorder %s20, 0
      %p74 = por %p72, %p73
      %p75 = scmp.ne.s32.totalorder %s61, %s62
      %p76 = scmp.eq.s32.totalorder %s21, 7
      %p77 = por %p75, %p76
      %p79 = scmp.ne.s32.totalorder %s62, %s78
      %p80 = scmp.eq.s32.totalorder %s21, 0
      %p81 = por %p79, %p80
      %s82 = ssub.s32 %s23, %s30
      %p83 = scmp.eq.s32.totalorder %s82, 0
      %s85 = sadd.s32 %s84, 1
      %s86 = scalar_select %p83, %s84, %s85
      %p89 = pneg %p83
      %p90 = scmp.eq.s32.totalorder %s15, 7
      %p91 = por %p89, %p90
      %p92 = scmp.ne.s32.totalorder %s84, %s87
      %p93 = scmp.eq.s32.totalorder %s15, 0
      %p94 = por %p92, %p93
      %p95 = scmp.ne.s32.totalorder %s84, %s87
      %p96 = scmp.eq.s32.totalorder %s20, 7
      %p97 = por %p95, %p96
      %p98 = scmp.ne.s32.totalorder %s87, %s88
      %p99 = scmp.eq.s32.totalorder %s20, 0
      %p100 = por %p98, %p99
      %p101 = scmp.ne.s32.totalorder %s87, %s88
      %p102 = scmp.eq.s32.totalorder %s21, 7
      %p103 = por %p101, %p102
      %p105 = scmp.ne.s32.totalorder %s88, %s104
      %p106 = scmp.eq.s32.totalorder %s21, 0
      %p107 = por %p105, %p106
      %s108 = ssub.s32 %s22, %s34
      %p109 = scmp.eq.s32.totalorder %s108, 0
      %s111 = sadd.s32 %s110, 1
      %s112 = scalar_select %p109, %s110, %s111
      %p115 = pneg %p109
      %p116 = scmp.eq.s32.totalorder %s15, 7
      %p117 = por %p115, %p116
      %p118 = scmp.ne.s32.totalorder %s110, %s113
      %p119 = scmp.eq.s32.totalorder %s15, 0
      %p120 = por %p118, %p119
      %p121 = scmp.ne.s32.totalorder %s110, %s113
      %p122 = scmp.eq.s32.totalorder %s20, 7
      %p123 = por %p121, %p122
      %p124 = scmp.ne.s32.totalorder %s113, %s114
      %p125 = scmp.eq.s32.totalorder %s20, 0
      %p126 = por %p124, %p125
      %p127 = scmp.ne.s32.totalorder %s113, %s114
      %p128 = scmp.eq.s32.totalorder %s21, 7
      %p129 = por %p127, %p128
      %p131 = scmp.ne.s32.totalorder %s114, %s130
      %p132 = scmp.eq.s32.totalorder %s21, 0
      %p133 = por %p131, %p132
      %s134 = ssub.s32 %s22, %s34
      %s135 = ssub.s32 %s23, %s30
      %s136 = sor.u32 %s134, %s135
      %p137 = scmp.eq.s32.totalorder %s136, 0
      %s139 = sadd.s32 %s138, 1
      %s140 = scalar_select %p137, %s138, %s139
      %p143 = pneg %p137
      %p144 = scmp.eq.s32.totalorder %s15, 7
      %p145 = por %p143, %p144
      %p146 = scmp.ne.s32.totalorder %s138, %s141
      %p147 = scmp.eq.s32.totalorder %s15, 0
      %p148 = por %p146, %p147
      %p149 = scmp.ne.s32.totalorder %s138, %s141
      %p150 = scmp.eq.s32.totalorder %s20, 7
      %p151 = por %p149, %p150
      %p152 = scmp.ne.s32.totalorder %s141, %s142
      %p153 = scmp.eq.s32.totalorder %s20, 0
      %p154 = por %p152, %p153
      %p155 = scmp.ne.s32.totalorder %s141, %s142
      %p156 = scmp.eq.s32.totalorder %s21, 7
      %p157 = por %p155, %p156
      %p159 = scmp.ne.s32.totalorder %s142, %s158
      %p160 = scmp.eq.s32.totalorder %s21, 0
      %p161 = por %p159, %p160
      %s162 = ssub.s32 %s22, %s34
      %p163 = scmp.eq.s32.totalorder %s162, 0
      %s165 = sadd.s32 %s164, 1
      %s166 = scalar_select %p163, %s164, %s165
      %p169 = pneg %p163
      %p170 = scmp.eq.s32.totalorder %s15, 7
      %p171 = por %p169, %p170
      %p172 = scmp.ne.s32.totalorder %s164, %s167
      %p173 = scmp.eq.s32.totalorder %s15, 0
      %p174 = por %p172, %p173
      %p175 = scmp.ne.s32.totalorder %s164, %s167
      %p176 = scmp.eq.s32.totalorder %s20, 7
      %p177 = por %p175, %p176
      %p178 = scmp.ne.s32.totalorder %s167, %s168
      %p179 = scmp.eq.s32.totalorder %s20, 0
      %p180 = por %p178, %p179
      %p181 = scmp.ne.s32.totalorder %s167, %s168
      %p182 = scmp.eq.s32.totalorder %s21, 7
      %p183 = por %p181, %p182
      %p185 = scmp.ne.s32.totalorder %s168, %s184
      %p186 = scmp.eq.s32.totalorder %s21, 0
      %p187 = por %p185, %p186
      %s188 = ssub.s32 %s22, %s34
      %p189 = scmp.eq.s32.totalorder %s188, 0
      %s191 = sadd.s32 %s190, 1
      %s192 = scalar_select %p189, %s190, %s191
      %p195 = pneg %p189
      %p196 = scmp.eq.s32.totalorder %s15, 7
      %p197 = por %p195, %p196
      %p198 = scmp.ne.s32.totalorder %s190, %s193
      %p199 = scmp.eq.s32.totalorder %s15, 0
      %p200 = por %p198, %p199
      %p201 = scmp.ne.s32.totalorder %s190, %s193
      %p202 = scmp.eq.s32.totalorder %s20, 7
      %p203 = por %p201, %p202
      %p204 = scmp.ne.s32.totalorder %s193, %s194
      %p205 = scmp.eq.s32.totalorder %s20, 0
      %p206 = por %p204, %p205
      %p207 = scmp.ne.s32.totalorder %s193, %s194
      %p208 = scmp.eq.s32.totalorder %s21, 7
      %p209 = por %p207, %p208
      %p211 = scmp.ne.s32.totalorder %s194, %s210
      %p212 = scmp.eq.s32.totalorder %s21, 0
      %p213 = por %p211, %p212
      %s214 = ssub.s32 %s22, %s34
      %p215 = scmp.eq.s32.totalorder %s214, 0
      %s217 = sadd.s32 %s216, 1
      %s218 = scalar_select %p215, %s216, %s217
      %p221 = pneg %p215
      %p222 = scmp.eq.s32.totalorder %s15, 7
      %p223 = por %p221, %p222
      %p224 = scmp.ne.s32.totalorder %s216, %s219
      %p225 = scmp.eq.s32.totalorder %s15, 0
      %p226 = por %p224, %p225
      %p227 = scmp.ne.s32.totalorder %s216, %s219
      %p228 = scmp.eq.s32.totalorder %s20, 7
      %p229 = por %p227, %p228
      %p230 = scmp.ne.s32.totalorder %s219, %s220
      %p231 = scmp.eq.s32.totalorder %s20, 0
      %p232 = por %p230, %p231
      %p233 = scmp.ne.s32.totalorder %s219, %s220
      %p234 = scmp.eq.s32.totalorder %s21, 7
      %p235 = por %p233, %p234
      %p237 = scmp.ne.s32.totalorder %s220, %s236
      %p238 = scmp.eq.s32.totalorder %s21, 0
      %p239 = por %p237, %p238
      %p240 = scmp.le.s32.totalorder 1, %s15
      %p241 = scmp.lt.s32.totalorder %s15, 9
      %p242 = pnand %p240, %p241
      %p243 = pneg %p242
      // Predicated region
      $region9: #{xy_loss_forward.2} parent=5 // pred_check
        _
      $region10: #{xy_loss_forward.2} parent=5 // pred_check_branch
        %245 = sbr.rel (%p242) target = $region12
      $region11: #{xy_loss_forward.2} parent=5 // pred_region
        %s246 = ssub.s32 %s15, 1
        // Predicated region
        $region13: #{xy_loss_forward.2} parent=11 // pred_check
          %p247 = pneg %p48
        $region14: #{xy_loss_forward.2} parent=11 // pred_check_branch
          %249 = sbr.rel (%p247) target = $region16
        $region15: #{xy_loss_forward.2} parent=11 // pred_region
          %251 = vsyncadd [#allocation4], 0
          %s253 = sshll.u32 %s0, 4
          %s254 = int_to_ptr.vmem [resolvable:$true] %s253
          %256 = dma.vmem_to_smem %s254, 16, [#allocation3], [#allocation4]
        $region16: #{xy_loss_forward.2} parent=11 // pred_fallthru
          _
      $region12: #{xy_loss_forward.2} parent=5 // pred_fallthru
        _
      %p257 = scmp.lt.s32.totalorder %s15, 8
      // Predicated region
      $region17: #{xy_loss_forward.2} parent=5 // pred_check
        %p258 = pneg %p257
      $region18: #{xy_loss_forward.2} parent=5 // pred_check_branch
        %260 = sbr.rel (%p258) target = $region20
      $region19: #{xy_loss_forward.2} parent=5 // pred_region
        // Predicated region
        $region21: #{xy_loss_forward.2} parent=19 // pred_check
          %p261 = pneg %p68
        $region22: #{xy_loss_forward.2} parent=19 // pred_check_branch
          %263 = sbr.rel (%p261) target = $region24
        $region23: #{xy_loss_forward.2} parent=19 // pred_region
          %s264 = smul.u32 2, %s22
          %p265 = scmp.lt.s32.totalorder %s264, 3
          %s266 = scalar_select %p265, %s264, 3
          %s267 = smul.addr %s266, 8
          %s268 = scalar_lea.vmem %s1, %s267
          %s269 = smul.u32 2, %s22
        $region24: #{xy_loss_forward.2} parent=19 // pred_fallthru
          _
        // Predicated region
        $region25: #{xy_loss_forward.2} parent=19 // pred_check
          %p270 = pneg %p94
        $region26: #{xy_loss_forward.2} parent=19 // pred_check_branch
          %272 = sbr.rel (%p270) target = $region28
        $region27: #{xy_loss_forward.2} parent=19 // pred_region
          %s273 = sand.u32 %s84, 1
          %s274 = sand.u32 %s84, 1
          %s275 = smul.addr %s274, 64
          %s276 = scalar_lea.vmem [#allocation5], %s275
          %s277 = smul.addr %s23, 4
          %s278 = scalar_lea.vmem %s2, %s277
          // Predicated region
          $region29: #{xy_loss_forward.2} parent=27 // pred_check
            _
          $region30: #{xy_loss_forward.2} parent=27 // pred_check_branch
            %280 = sbr.rel (0) target = $region32
          $region31: #{xy_loss_forward.2} parent=27 // pred_region
            // Predicated region
            $region33: #{xy_loss_forward.2} parent=31 // pred_check
              _
            $region34: #{xy_loss_forward.2} parent=31 // pred_check_branch
              %282 = sbr.rel target = $region36
            $region35: #{xy_loss_forward.2} parent=31 // pred_region
              // Predicated region
              $region48: #{xy_loss_forward.2} parent=35 // pred_check
                _
              $region49: #{xy_loss_forward.2} parent=35 // pred_check_branch
                %328 = sbr.rel (0) target = $region51
              $region50: #{xy_loss_forward.2} parent=35 // pred_region
                loop: start=0, step=1, limit=1
                $region52: #{xy_loss_forward.2} parent=50 // loop_pre_header
                  _
                $region53: #{xy_loss_forward.2} parent=50 // loop_header
                  %s330 = sphi 0, %s334
                  %p331 = scmp.ge.s32.totalorder %s330, 1
                  %s335 = sphi %s278, %s278
                  %s336 = sphi %s276, %s276
                $region54: #{xy_loss_forward.2} parent=50 // loop_header_branch
                  %333 = sbr.rel (%p331) target = $region58
                $region55: #{xy_loss_forward.2} parent=50 // loop_body
                  _
                $region56: #{xy_loss_forward.2} parent=50 // loop_footer
                  %s334 = sadd.s32 1, %s330
                $region57: #{xy_loss_forward.2} parent=50 // loop_footer_branch
                  %329 = sbr.rel target = $region53
                $region58: #{xy_loss_forward.2} parent=50 // loop_exit
                  _
                %s338 = ssub.s32 16, 1
                loop: start=0, step=1, limit=1
                $region59: #{xy_loss_forward.2} parent=50 // loop_pre_header
                  _
                $region60: #{xy_loss_forward.2} parent=50 // loop_header
                  %s340 = sphi 0, %s344
                  %p341 = scmp.ge.s32.totalorder %s340, 1
                  %s345 = sphi %s278, %s278
                  %s346 = sphi %s276, %s276
                $region61: #{xy_loss_forward.2} parent=50 // loop_header_branch
                  %343 = sbr.rel (%p341) target = $region65
                $region62: #{xy_loss_forward.2} parent=50 // loop_body
                  %v347 = vld [vmem:[%s345] sm:%s338]
                  %348 = vst [vmem:[%s346] sm:%s338] %v347
                  %v349 = vld [vmem:[%s345 + $0x10] sm:%s338]
                  %350 = vst [vmem:[%s346 + $0x4] sm:%s338] %v349
                  %v351 = vld [vmem:[%s345 + $0x20] sm:%s338]
                  %352 = vst [vmem:[%s346 + $0x8] sm:%s338] %v351
                  %v353 = vld [vmem:[%s345 + $0x30] sm:%s338]
                  %354 = vst [vmem:[%s346 + $0xc] sm:%s338] %v353
                  %v355 = vld [vmem:[%s345 + $0x40] sm:%s338]
                  %356 = vst [vmem:[%s346 + $0x10] sm:%s338] %v355
                  %v357 = vld [vmem:[%s345 + $0x50] sm:%s338]
                  %358 = vst [vmem:[%s346 + $0x14] sm:%s338] %v357
                  %v359 = vld [vmem:[%s345 + $0x60] sm:%s338]
                  %360 = vst [vmem:[%s346 + $0x18] sm:%s338] %v359
                  %v361 = vld [vmem:[%s345 + $0x70] sm:%s338]
                  %362 = vst [vmem:[%s346 + $0x1c] sm:%s338] %v361
                  %v363 = vld [vmem:[%s345 + $0x80] sm:%s338]
                  %364 = vst [vmem:[%s346 + $0x20] sm:%s338] %v363
                  %v365 = vld [vmem:[%s345 + $0x90] sm:%s338]
                  %366 = vst [vmem:[%s346 + $0x24] sm:%s338] %v365
                  %v367 = vld [vmem:[%s345 + $0xa0] sm:%s338]
                  %368 = vst [vmem:[%s346 + $0x28] sm:%s338] %v367
                  %v369 = vld [vmem:[%s345 + $0xb0] sm:%s338]
                  %370 = vst [vmem:[%s346 + $0x2c] sm:%s338] %v369
                  %v371 = vld [vmem:[%s345 + $0xc0] sm:%s338]
                  %372 = vst [vmem:[%s346 + $0x30] sm:%s338] %v371
                  %v373 = vld [vmem:[%s345 + $0xd0] sm:%s338]
                  %374 = vst [vmem:[%s346 + $0x34] sm:%s338] %v373
                  %v375 = vld [vmem:[%s345 + $0xe0] sm:%s338]
                  %376 = vst [vmem:[%s346 + $0x38] sm:%s338] %v375
                  %v377 = vld [vmem:[%s345 + $0xf0] sm:%s338]
                  %378 = vst [vmem:[%s346 + $0x3c] sm:%s338] %v377
                $region63: #{xy_loss_forward.2} parent=50 // loop_footer
                  %s344 = sadd.s32 1, %s340
                $region64: #{xy_loss_forward.2} parent=50 // loop_footer_branch
                  %339 = sbr.rel target = $region60
                $region65: #{xy_loss_forward.2} parent=50 // loop_exit
                  _
              $region51: #{xy_loss_forward.2} parent=35 // pred_fallthru
                _
            $region36: #{xy_loss_forward.2} parent=31 // pred_fallthru
              _
            // Predicated region
            $region37: #{xy_loss_forward.2} parent=31 // pred_check
              _
            $region38: #{xy_loss_forward.2} parent=31 // pred_check_branch
              %284 = sbr.rel (0) target = $region40
            $region39: #{xy_loss_forward.2} parent=31 // pred_region
              %s286 = ssub.s32 16, 1
              loop: start=0, step=1, limit=1
              $region41: #{xy_loss_forward.2} parent=39 // loop_pre_header
                _
              $region42: #{xy_loss_forward.2} parent=39 // loop_header
                %s288 = sphi 0, %s292
                %p289 = scmp.ge.s32.totalorder %s288, 1
                %s293 = sphi %s278, %s278
                %s294 = sphi %s276, %s276
              $region43: #{xy_loss_forward.2} parent=39 // loop_header_branch
                %291 = sbr.rel (%p289) target = $region47
              $region44: #{xy_loss_forward.2} parent=39 // loop_body
                %v295 = vld [vmem:[%s293] sm:%s286]
                %296 = vst [vmem:[%s294] sm:%s286] %v295
                %v297 = vld [vmem:[%s293 + $0x10] sm:%s286]
                %298 = vst [vmem:[%s294 + $0x4] sm:%s286] %v297
                %v299 = vld [vmem:[%s293 + $0x20] sm:%s286]
                %300 = vst [vmem:[%s294 + $0x8] sm:%s286] %v299
                %v301 = vld [vmem:[%s293 + $0x30] sm:%s286]
                %302 = vst [vmem:[%s294 + $0xc] sm:%s286] %v301
                %v303 = vld [vmem:[%s293 + $0x40] sm:%s286]
                %304 = vst [vmem:[%s294 + $0x10] sm:%s286] %v303
                %v305 = vld [vmem:[%s293 + $0x50] sm:%s286]
                %306 = vst [vmem:[%s294 + $0x14] sm:%s286] %v305
                %v307 = vld [vmem:[%s293 + $0x60] sm:%s286]
                %308 = vst [vmem:[%s294 + $0x18] sm:%s286] %v307
                %v309 = vld [vmem:[%s293 + $0x70] sm:%s286]
                %310 = vst [vmem:[%s294 + $0x1c] sm:%s286] %v309
                %v311 = vld [vmem:[%s293 + $0x80] sm:%s286]
                %312 = vst [vmem:[%s294 + $0x20] sm:%s286] %v311
                %v313 = vld [vmem:[%s293 + $0x90] sm:%s286]
                %314 = vst [vmem:[%s294 + $0x24] sm:%s286] %v313
                %v315 = vld [vmem:[%s293 + $0xa0] sm:%s286]
                %316 = vst [vmem:[%s294 + $0x28] sm:%s286] %v315
                %v317 = vld [vmem:[%s293 + $0xb0] sm:%s286]
                %318 = vst [vmem:[%s294 + $0x2c] sm:%s286] %v317
                %v319 = vld [vmem:[%s293 + $0xc0] sm:%s286]
                %320 = vst [vmem:[%s294 + $0x30] sm:%s286] %v319
                %v321 = vld [vmem:[%s293 + $0xd0] sm:%s286]
                %322 = vst [vmem:[%s294 + $0x34] sm:%s286] %v321
                %v323 = vld [vmem:[%s293 + $0xe0] sm:%s286]
                %324 = vst [vmem:[%s294 + $0x38] sm:%s286] %v323
                %v325 = vld [vmem:[%s293 + $0xf0] sm:%s286]
                %326 = vst [vmem:[%s294 + $0x3c] sm:%s286] %v325
              $region45: #{xy_loss_forward.2} parent=39 // loop_footer
                %s292 = sadd.s32 1, %s288
              $region46: #{xy_loss_forward.2} parent=39 // loop_footer_branch
                %287 = sbr.rel target = $region42
              $region47: #{xy_loss_forward.2} parent=39 // loop_exit
                _
            $region40: #{xy_loss_forward.2} parent=31 // pred_fallthru
              _
          $region32: #{xy_loss_forward.2} parent=27 // pred_fallthru
            _
          %379 = vnop
        $region28: #{xy_loss_forward.2} parent=19 // pred_fallthru
          _
        // Predicated region
        $region66: #{xy_loss_forward.2} parent=19 // pred_check
          %p380 = pneg %p120
        $region67: #{xy_loss_forward.2} parent=19 // pred_check_branch
          %382 = sbr.rel (%p380) target = $region69
        $region68: #{xy_loss_forward.2} parent=19 // pred_region
          %s383 = smul.u32 2, %s22
          %p384 = scmp.lt.s32.totalorder %s383, 3
          %s385 = scalar_select %p384, %s383, 3
          %s386 = smul.addr %s385, 4
          %s387 = scalar_lea.vmem %s3, %s386
          %s388 = smul.u32 2, %s22
        $region69: #{xy_loss_forward.2} parent=19 // pred_fallthru
          _
      $region20: #{xy_loss_forward.2} parent=5 // pred_fallthru
        _
      %p389 = scmp.le.s32.totalorder 1, %s15
      %p390 = scmp.lt.s32.totalorder %s15, 9
      %p391 = pnand %p389, %p390
      %p392 = pneg %p391
      // Predicated region
      $region70: #{xy_loss_forward.2} parent=5 // pred_check
        _
      $region71: #{xy_loss_forward.2} parent=5 // pred_check_branch
        %394 = sbr.rel (%p391) target = $region73
      $region72: #{xy_loss_forward.2} parent=5 // pred_region
        %s395 = ssub.s32 %s15, 1
        // Predicated region
        $region74: #{xy_loss_forward.2} parent=72 // pred_check
          %p396 = pneg %p48
        $region75: #{xy_loss_forward.2} parent=72 // pred_check_branch
          %398 = sbr.rel (%p396) target = $region77
        $region76: #{xy_loss_forward.2} parent=72 // pred_region
          %400 = dma.done [#allocation4], 16
        $region77: #{xy_loss_forward.2} parent=72 // pred_fallthru
          _
        %s401 = sand.u32 %s87, 1
        %s402 = sand.u32 %s87, 1
        %s403 = smul.addr %s402, 64
        %s404 = scalar_lea.vmem [#allocation5], %s403
        // Predicated region
        $region78: #{xy_loss_forward.2} parent=72 // pred_check
          %p405 = pneg %p100
        $region79: #{xy_loss_forward.2} parent=72 // pred_check_branch
          %407 = sbr.rel (%p405) target = $region81
        $region80: #{xy_loss_forward.2} parent=72 // pred_region
          _
        $region81: #{xy_loss_forward.2} parent=72 // pred_fallthru
          _
        %408 = sfence
        %p409 = pneg %p48
        %p410 = pneg %p45
        %s411 = smul.u32 2, %s24
        %p412 = scmp.lt.s32.totalorder %s411, 3
        %s413 = scalar_select %p412, %s411, 3
        %s414 = smul.addr %s413, 8
        %s415 = scalar_lea.vmem %s1, %s414
        %p416 = pneg %p74
        %p417 = pneg %p71
        %s418 = sand.u32 %s87, 1
        %s419 = sand.u32 %s87, 1
        %s420 = smul.addr %s419, 64
        %s421 = scalar_lea.vmem [#allocation5], %s420
        %p422 = pneg %p100
        %p423 = pneg %p97
        %s424 = smul.u32 2, %s24
        %p425 = scmp.lt.s32.totalorder %s424, 3
        %s426 = scalar_select %p425, %s424, 3
        %s427 = smul.addr %s426, 4
        %s428 = scalar_lea.vmem %s3, %s427
        %p429 = pneg %p126
        %p430 = pneg %p123
        %p431 = pneg %p154
        %p432 = pneg %p151
        %s433 = sand.u32 %s141, 1
        %s434 = sand.u32 %s141, 1
        %s435 = smul.addr %s434, 16
        %s436 = scalar_lea.vmem [#allocation6], %s435
        %p437 = pneg %p180
        %p438 = pneg %p177
        %s439 = smul.u32 2, %s24
        %p440 = scmp.lt.s32.totalorder %s439, 3
        %s441 = scalar_select %p440, %s439, 3
        %s442 = smul.addr %s441, 8
        %s443 = scalar_lea.vmem %s5, %s442
        %p444 = pneg %p206
        %p445 = pneg %p203
        %s446 = smul.u32 2, %s24
        %p447 = scmp.lt.s32.totalorder %s446, 3
        %s448 = scalar_select %p447, %s446, 3
        %s449 = smul.addr %s448, 8
        %s450 = scalar_lea.vmem %s6, %s449
        %p451 = pneg %p232
        %p452 = pneg %p229
        %s453 = smul.u32 2, %s24
        %p454 = scmp.lt.s32.totalorder %s453, 3
        %s455 = scalar_select %p454, %s453, 3
        %s456 = smul.addr %s455, 8
        %s457 = scalar_lea.vmem %s7, %s456
        %s458 = smul.u32 2, %s24
        %p459 = scmp.lt.s32.totalorder %s458, 3
        %s460 = scalar_select %p459, %s458, 3
        %s461 = smul.addr %s460, 8
        %s462 = scalar_lea.vmem %s1, %s461
        %s463 = smul.u32 2, %s24
        %s464 = smul.u32 2, %s24
        %p465 = scmp.lt.s32.totalorder %s464, 3
        %s466 = scalar_select %p465, %s464, 3
        %s467 = smul.addr %s466, 4
        %s468 = scalar_lea.vmem %s3, %s467
        %s469 = smul.u32 2, %s24
        %s470 = smul.u32 2, %s24
        %s471 = smul.u32 2, %s24
        %p472 = scmp.lt.s32.totalorder %s471, 3
        %s473 = scalar_select %p472, %s471, 3
        %s474 = smul.addr %s473, 8
        %s475 = scalar_lea.vmem %s5, %s474
        %s476 = smul.u32 2, %s24
        %s477 = smul.u32 2, %s24
        %p478 = scmp.lt.s32.totalorder %s477, 3
        %s479 = scalar_select %p478, %s477, 3
        %s480 = smul.addr %s479, 8
        %s481 = scalar_lea.vmem %s6, %s480
        %s482 = smul.u32 2, %s24
        %s483 = smul.u32 2, %s24
        %p484 = scmp.lt.s32.totalorder %s483, 3
        %s485 = scalar_select %p484, %s483, 3
        %s486 = smul.addr %s485, 8
        %s487 = scalar_lea.vmem %s7, %s486
        %s488 = smul.u32 2, %s24
        %p489 = scmp.eq.s32.totalorder %s25, 0
        // Predicated region
        $region82: #{xy_loss_forward.2} parent=72 // pred_check
          %p490 = pneg %p489
        $region83: #{xy_loss_forward.2} parent=72 // pred_check_branch
          %492 = sbr.rel (%p490) target = $region85
        $region84: #{xy_loss_forward.2} parent=72 // pred_region
          %v493 = vld [vmem:[%s462] sm:$0xff]
          %v494 = vld [vmem:[%s462 + $0x8] sm:$0xff]
          %v495 = vmul.f32 %v493, %v493
          %v496 = vmul.f32 %v494, %v494
          %497 = vadd.xlane.f32.xlu0 %v495
          %v498 = vpop.xlane.xlu0 %497
          %499 = vadd.xlane.f32.xlu0 %v496
          %v500 = vpop.xlane.xlu0 %499
          %v501 = vrsqrt.pop %v498
          %v502 = vmul.f32 %v501, %v498
          %v503 = vmul.f32 %v502, %v501
          %v504 = vmul.f32 0.5, %v503
          %v505 = vsub.f32 1.5, %v504
          %v506 = vmul.f32 %v501, %v505
          %vm507 = vweird.f32 %v498
          %vm508 = vweird.f32 %v501
          %vm509 = vmor %vm507, %vm508
          %v510 = vsel %vm509, %v501, %v506
          %v511 = vrsqrt.pop %v500
          %v512 = vmul.f32 %v511, %v500
          %v513 = vmul.f32 %v512, %v511
          %v514 = vmul.f32 0.5, %v513
          %v515 = vsub.f32 1.5, %v514
          %v516 = vmul.f32 %v511, %v515
          %vm517 = vweird.f32 %v500
          %vm518 = vweird.f32 %v511
          %vm519 = vmor %vm517, %vm518
          %v520 = vsel %vm519, %v511, %v516
          %v521 = vmin.f32 %v510, 1e+12
          %v522 = vmin.f32 %v520, 1e+12
          %v523 = vmul.f32 %v493, %v521
          %v524 = vmul.f32 %v494, %v522
          %v525 = vpack.c.bf16 %v523, %v523
          %v526 = vpack.c.bf16 %v524, %v524
          %527 = vst [vmem:[#allocation2] sm:$0xf] %v525
          %528 = vst [vmem:[#allocation2 + $0x4] sm:$0xf] %v526
          %v529 = vld [vmem:[#allocation2] sm:$0xf]
          %v530 = vld [vmem:[#allocation2 + $0x4] sm:$0xf]
          %v531 = vunpack.c.l.bf16 %v529
          %v532 = vunpack.c.l.bf16 %v530
          %v533 = vld [vmem:[%s468] sm:$0xf]
          %v534 = vld [vmem:[%s468 + $0x4] sm:$0xf]
          %v535 = vunpack.c.l.bf16 %v533
          %v536 = vunpack.c.l.bf16 %v534
          %v537 = vmul.f32 %v531, %v535
          %v538 = vmul.f32 %v532, %v536
          %539 = vadd.xlane.f32.xlu0 %v537
          %v540 = vpop.xlane.xlu0 %539
          %541 = vadd.xlane.f32.xlu0 %v538
          %v542 = vpop.xlane.xlu0 %541
          %v543 = vmax.f32 %v540, -1.0
          %v544 = vmax.f32 %v542, -1.0
          %v545 = vmin.f32 %v543, 1.0
          %v546 = vmin.f32 %v544, 1.0
          %s547 = sld [smem:[#allocation3]]
          %s548 = sld [smem:[#allocation3 + $0x1]]
          %s549 = sld [smem:[#allocation3 + $0x2]]
          %s550 = sld [smem:[#allocation3 + $0x3]]
          %s551 = sld [smem:[#allocation3 + $0x4]]
          %s552 = sld [smem:[#allocation3 + $0x5]]
          %s553 = sld [smem:[#allocation3 + $0x6]]
          %v554 = vmul.f32 %v545, %v545
          %v555 = vmul.f32 %v546, %v546
          %v556 = vsub.f32 1.0, %v554
          %v557 = vsub.f32 1.0, %v555
          %v558 = vmax.f32 %v556, 0.0
          %v559 = vmax.f32 %v557, 0.0
          %v560 = vrsqrt.pop %v558
          %v561 = vmul.f32 %v560, %v558
          %v562 = vmul.f32 %v561, %v560
          %v563 = vmul.f32 0.5, %v562
          %v564 = vsub.f32 1.5, %v563
          %v565 = vmul.f32 %v560, %v564
          %v566 = vmul.f32 %v558, %v565
          %vm567 = vcmp.eq.f32.partialorder %v558, inf
          %v568 = vsel %vm567, %v558, %v566
          %vm569 = vcmp.eq.f32.partialorder %v558, 0.0
          %v570 = vand.u32 %v558, 2147483648
          %v571 = vsel %vm569, %v570, %v568
          %v572 = vrsqrt.pop %v559
          %v573 = vmul.f32 %v572, %v559
          %v574 = vmul.f32 %v573, %v572
          %v575 = vmul.f32 0.5, %v574
          %v576 = vsub.f32 1.5, %v575
          %v577 = vmul.f32 %v572, %v576
          %v578 = vmul.f32 %v559, %v577
          %vm579 = vcmp.eq.f32.partialorder %v559, inf
          %v580 = vsel %vm579, %v559, %v578
          %vm581 = vcmp.eq.f32.partialorder %v559, 0.0
          %v582 = vand.u32 %v559, 2147483648
          %v583 = vsel %vm581, %v582, %v580
          %v584 = vstv %s547
          %v585 = vmul.f32 %v545, %v584
          %v586 = vmul.f32 %v546, %v584
          %v587 = vstv %s548
          %v588 = vmul.f32 %v571, %v587
          %v589 = vmul.f32 %v583, %v587
          %v590 = vsub.f32 %v585, %v588
          %v591 = vsub.f32 %v586, %v589
          %v592 = vstv %s551
          %v593 = vmul.f32 %v545, %v592
          %v594 = vmul.f32 %v546, %v592
          %v595 = vstv %s552
          %v596 = vmul.f32 %v571, %v595
          %v597 = vmul.f32 %v583, %v595
          %v598 = vsub.f32 %v593, %v596
          %v599 = vsub.f32 %v594, %v597
          %v600 = vstv %s549
          %vm601 = vcmp.gt.f32.partialorder %v545, %v600
          %vm602 = vcmp.gt.f32.partialorder %v546, %v600
          %v603 = vstv %s550
          %v604 = vsub.f32 %v545, %v603
          %v605 = vsub.f32 %v546, %v603
          %v606 = vsel %vm601, %v590, %v604
          %v607 = vsel %vm602, %v591, %v605
          %vm608 = vcmask 7168
          %609 = vst.msk [vmem:[%s475] sm:$0xff] %vm608, %v606
          %610 = vst.msk [vmem:[%s475 + $0x8] sm:$0xff] %vm608, %v607
          %vm611 = vcmp.le.f32.partialorder %v545, %v592
          %vm612 = vcmp.le.f32.partialorder %v546, %v592
          %v613 = vstv %s553
          %v614 = vadd.f32 %v545, %v613
          %v615 = vadd.f32 %v546, %v613
          %v616 = vsel %vm611, %v598, %v614
          %v617 = vsel %vm612, %v599, %v615
          %618 = vst.msk [vmem:[%s481] sm:$0xff] %vm608, %v616
          %619 = vst.msk [vmem:[%s481 + $0x8] sm:$0xff] %vm608, %v617
          %620 = vst.msk [vmem:[%s487] sm:$0xff] %vm608, 0.0
          %621 = vst.msk [vmem:[%s487 + $0x8] sm:$0xff] %vm608, 0.0
        $region85: #{xy_loss_forward.2} parent=72 // pred_fallthru
          _
        %v622 = vld [vmem:[#allocation2] sm:$0xf]
        %v623 = vld [vmem:[#allocation2 + $0x4] sm:$0xf]
        %v624 = vld [vmem:[%s404] sm:$0xf]
        %v625 = vld [vmem:[%s404 + $0x4] sm:$0xf]
        %v626 = vld [vmem:[%s404 + $0x8] sm:$0xf]
        %v627 = vld [vmem:[%s404 + $0xc] sm:$0xf]
        %v628 = vld [vmem:[%s404 + $0x10] sm:$0xf]
        %v629 = vld [vmem:[%s404 + $0x14] sm:$0xf]
        %v630 = vld [vmem:[%s404 + $0x18] sm:$0xf]
        %v631 = vld [vmem:[%s404 + $0x1c] sm:$0xf]
        %v632 = vld [vmem:[%s404 + $0x20] sm:$0xf]
        %v633 = vld [vmem:[%s404 + $0x24] sm:$0xf]
        %v634 = vld [vmem:[%s404 + $0x28] sm:$0xf]
        %v635 = vld [vmem:[%s404 + $0x2c] sm:$0xf]
        %v636 = vld [vmem:[%s404 + $0x30] sm:$0xf]
        %v637 = vld [vmem:[%s404 + $0x34] sm:$0xf]
        %v638 = vld [vmem:[%s404 + $0x38] sm:$0xf]
        %v639 = vld [vmem:[%s404 + $0x3c] sm:$0xf]
        %v642 = vunpack.c.l.b16 %v622
        %v643 = vunpack.c.l.b16 %v623
        %v644 = vpack.c.b16 %v643, %v642
        %v662 = vunpack.c.l.b16 %v624
        %v663 = vunpack.c.l.b16 %v625
        %v664 = vunpack.c.l.b16 %v626
        %v665 = vunpack.c.l.b16 %v627
        %v666 = vunpack.c.l.b16 %v628
        %v667 = vunpack.c.l.b16 %v629
        %v668 = vunpack.c.l.b16 %v630
        %v669 = vunpack.c.l.b16 %v631
        %v670 = vunpack.c.l.b16 %v632
        %v671 = vunpack.c.l.b16 %v633
        %v672 = vunpack.c.l.b16 %v634
        %v673 = vunpack.c.l.b16 %v635
        %v674 = vunpack.c.l.b16 %v636
        %v675 = vunpack.c.l.b16 %v637
        %v676 = vunpack.c.l.b16 %v638
        %v677 = vunpack.c.l.b16 %v639
        %v678 = vpack.c.b16 %v663, %v662
        %v679 = vpack.c.b16 %v665, %v664
        %v680 = vpack.c.b16 %v667, %v666
        %v681 = vpack.c.b16 %v669, %v668
        %v682 = vpack.c.b16 %v671, %v670
        %v683 = vpack.c.b16 %v673, %v672
        %v684 = vpack.c.b16 %v675, %v674
        %v685 = vpack.c.b16 %v677, %v676
        %694 = vmatpush.bf16.msra.mxu0 %v685
        %695 = vmatpush.bf16.msra.mxu0 %v684
        %696 = vmatpush.bf16.msra.mxu0 %v683
        %697 = vmatpush.bf16.msra.mxu0 %v682
        %698 = vmatpush.bf16.msra.mxu0 %v681
        %699 = vmatpush.bf16.msra.mxu0 %v680
        %700 = vmatpush.bf16.msra.mxu0 %v679
        %701 = vmatpush.bf16.msra.mxu0 %v678
        %702 = vmatmul.bf16.gmra.mxu0 %v644
        %v703 = vpop.f32.mrf.mxu0
        %v704 = vadd.f32 0.0, %v703
        %v705 = vpop.f32.mrf.mxu0
        %v706 = vadd.f32 0.0, %v705
        %707 = vdwg.mxu0
        %v708 = vmax.f32 %v704, -1.0
        %v709 = vmax.f32 %v706, -1.0
        %v710 = vmin.f32 %v708, 1.0
        %v711 = vmin.f32 %v709, 1.0
        %712 = vst [vmem:[%s436] sm:$0xff] %v710
        %713 = vst [vmem:[%s436 + $0x8] sm:$0xff] %v711
        %v714 = vld [vmem:[%s487] sm:$0xff]
        %v715 = vld [vmem:[%s487 + $0x8] sm:$0xff]
        %v716 = vld [vmem:[%s475] sm:$0xff]
        %v717 = vld [vmem:[%s475 + $0x8] sm:$0xff]
        %719 = vset.pattern.permute.xlu0 0
        %720 = vperm.xlu0 %719, %v716
        %v721 = vpop.permute.xlu0 %720
        %724 = vset.pattern.permute.xlu0 0
        %725 = vperm.xlu0 %724, %v717
        %v726 = vpop.permute.xlu0 %725
        %vm728 = vcmp.gt.f32.partialorder %v710, %v721
        %vm729 = vcmp.gt.f32.partialorder %v711, %v726
        %v730 = vsel %vm728, 1, 0
        %v731 = vsel %vm729, 1, 0
        %v732 = vcvt.s32.f32 %v730
        %v733 = vcvt.s32.f32 %v731
        %734 = vadd.xlane.f32.xlu0 %v732
        %v735 = vpop.xlane.xlu0 %734
        %736 = vadd.xlane.f32.xlu0 %v733
        %v737 = vpop.xlane.xlu0 %736
        %v738 = vadd.f32 %v714, %v735
        %v739 = vadd.f32 %v715, %v737
        %vm740 = vcmask 7168
        %741 = vst.msk [vmem:[%s487] sm:$0xff] %vm740, %v738
        %742 = vst.msk [vmem:[%s487 + $0x8] sm:$0xff] %vm740, %v739
        %s743 = sand.u32 %s141, 1
        %s744 = sand.u32 %s141, 1
        %s745 = smul.addr %s744, 16
        %s746 = scalar_lea.vmem [#allocation6], %s745
        %s747 = smul.u32 2, %s24
        %p748 = scmp.lt.s32.totalorder %s747, 3
        %s749 = scalar_select %p748, %s747, 3
        %s750 = smul.addr %s749, 8
        %s751 = scalar_lea.vmem %s5, %s750
        %s752 = smul.u32 2, %s24
        %p753 = scmp.lt.s32.totalorder %s752, 3
        %s754 = scalar_select %p753, %s752, 3
        %s755 = smul.addr %s754, 8
        %s756 = scalar_lea.vmem %s6, %s755
        %s757 = smul.u32 2, %s24
        %p758 = scmp.lt.s32.totalorder %s757, 3
        %s759 = scalar_select %p758, %s757, 3
        %s760 = smul.addr %s759, 8
        %s761 = scalar_lea.vmem %s7, %s760
        // Predicated region
        $region86: #{xy_loss_forward.2} parent=72 // pred_check
          %p762 = pneg %p151
        $region87: #{xy_loss_forward.2} parent=72 // pred_check_branch
          %764 = sbr.rel (%p762) target = $region89
        $region88: #{xy_loss_forward.2} parent=72 // pred_region
          %s765 = smul.u32 2, %s24
          %s766 = smul.addr %s765, 4
          %s767 = sadd.s32 %s25, %s766
          %s768 = smul.addr %s767, 8
          %s769 = scalar_lea.vmem %s4, %s768
          // Predicated region
          $region90: #{xy_loss_forward.2} parent=88 // pred_check
            _
          $region91: #{xy_loss_forward.2} parent=88 // pred_check_branch
            %771 = sbr.rel (0) target = $region93
          $region92: #{xy_loss_forward.2} parent=88 // pred_region
            // Predicated region
            $region94: #{xy_loss_forward.2} parent=92 // pred_check
              _
            $region95: #{xy_loss_forward.2} parent=92 // pred_check_branch
              %773 = sbr.rel (0) target = $region97
            $region96: #{xy_loss_forward.2} parent=92 // pred_region
              // Predicated region
              $region109: #{xy_loss_forward.2} parent=96 // pred_check
                _
              $region110: #{xy_loss_forward.2} parent=96 // pred_check_branch
                %791 = sbr.rel (0) target = $region112
              $region111: #{xy_loss_forward.2} parent=96 // pred_region
                loop: start=0, step=1, limit=1
                $region113: #{xy_loss_forward.2} parent=111 // loop_pre_header
                  _
                $region114: #{xy_loss_forward.2} parent=111 // loop_header
                  %s793 = sphi 0, %s797
                  %p794 = scmp.ge.s32.totalorder %s793, 1
                  %s798 = sphi %s746, %s746
                  %s799 = sphi %s769, %s769
                $region115: #{xy_loss_forward.2} parent=111 // loop_header_branch
                  %796 = sbr.rel (%p794) target = $region119
                $region116: #{xy_loss_forward.2} parent=111 // loop_body
                  %v800 = vld [vmem:[%s798] sm:$0xff]
                  %801 = vst [vmem:[%s799] sm:$0xff] %v800
                  %v802 = vld [vmem:[%s798 + $0x8] sm:$0xff]
                  %803 = vst [vmem:[%s799 + $0x20] sm:$0xff] %v802
                $region117: #{xy_loss_forward.2} parent=111 // loop_footer
                  %s797 = sadd.s32 1, %s793
                $region118: #{xy_loss_forward.2} parent=111 // loop_footer_branch
                  %792 = sbr.rel target = $region114
                $region119: #{xy_loss_forward.2} parent=111 // loop_exit
                  _
              $region112: #{xy_loss_forward.2} parent=96 // pred_fallthru
                _
              // Predicated region
              $region120: #{xy_loss_forward.2} parent=96 // pred_check
                _
              $region121: #{xy_loss_forward.2} parent=96 // pred_check_branch
                %805 = sbr.rel target = $region123
              $region122: #{xy_loss_forward.2} parent=96 // pred_region
                _
              $region123: #{xy_loss_forward.2} parent=96 // pred_fallthru
                _
            $region97: #{xy_loss_forward.2} parent=92 // pred_fallthru
              _
            // Predicated region
            $region98: #{xy_loss_forward.2} parent=92 // pred_check
              _
            $region99: #{xy_loss_forward.2} parent=92 // pred_check_branch
              %775 = sbr.rel target = $region101
            $region100: #{xy_loss_forward.2} parent=92 // pred_region
              %s777 = ssub.s32 256, 1
              loop: start=0, step=1, limit=1
              $region102: #{xy_loss_forward.2} parent=100 // loop_pre_header
                _
              $region103: #{xy_loss_forward.2} parent=100 // loop_header
                %s779 = sphi 0, %s783
                %p780 = scmp.ge.s32.totalorder %s779, 1
                %s784 = sphi %s746, %s746
                %s785 = sphi %s769, %s769
              $region104: #{xy_loss_forward.2} parent=100 // loop_header_branch
                %782 = sbr.rel (%p780) target = $region108
              $region105: #{xy_loss_forward.2} parent=100 // loop_body
                %v786 = vld [vmem:[%s784] sm:%s777]
                %787 = vst [vmem:[%s785] sm:%s777] %v786
                %v788 = vld [vmem:[%s784 + $0x8] sm:%s777]
                %789 = vst [vmem:[%s785 + $0x20] sm:%s777] %v788
              $region106: #{xy_loss_forward.2} parent=100 // loop_footer
                %s783 = sadd.s32 1, %s779
              $region107: #{xy_loss_forward.2} parent=100 // loop_footer_branch
                %778 = sbr.rel target = $region103
              $region108: #{xy_loss_forward.2} parent=100 // loop_exit
                _
            $region101: #{xy_loss_forward.2} parent=92 // pred_fallthru
              _
          $region93: #{xy_loss_forward.2} parent=88 // pred_fallthru
            _
          %806 = vnop
        $region89: #{xy_loss_forward.2} parent=72 // pred_fallthru
          _
        // Predicated region
        $region124: #{xy_loss_forward.2} parent=72 // pred_check
          %p807 = pneg %p177
        $region125: #{xy_loss_forward.2} parent=72 // pred_check_branch
          %809 = sbr.rel (%p807) target = $region127
        $region126: #{xy_loss_forward.2} parent=72 // pred_region
          %s810 = smul.u32 2, %s24
        $region127: #{xy_loss_forward.2} parent=72 // pred_fallthru
          _
        // Predicated region
        $region128: #{xy_loss_forward.2} parent=72 // pred_check
          %p811 = pneg %p203
        $region129: #{xy_loss_forward.2} parent=72 // pred_check_branch
          %813 = sbr.rel (%p811) target = $region131
        $region130: #{xy_loss_forward.2} parent=72 // pred_region
          %s814 = smul.u32 2, %s24
        $region131: #{xy_loss_forward.2} parent=72 // pred_fallthru
          _
        // Predicated region
        $region132: #{xy_loss_forward.2} parent=72 // pred_check
          %p815 = pneg %p229
        $region133: #{xy_loss_forward.2} parent=72 // pred_check_branch
          %817 = sbr.rel (%p815) target = $region135
        $region134: #{xy_loss_forward.2} parent=72 // pred_region
          %s818 = smul.u32 2, %s24
        $region135: #{xy_loss_forward.2} parent=72 // pred_fallthru
          _
      $region73: #{xy_loss_forward.2} parent=5 // pred_fallthru
        _
      %p819 = scmp.le.s32.totalorder 2, %s15
      // Predicated region
      $region136: #{xy_loss_forward.2} parent=5 // pred_check
        %p820 = pneg %p819
      $region137: #{xy_loss_forward.2} parent=5 // pred_check_branch
        %822 = sbr.rel (%p820) target = $region139
      $region138: #{xy_loss_forward.2} parent=5 // pred_region
        %s823 = ssub.s32 %s15, 2
        // Predicated region
        $region140: #{xy_loss_forward.2} parent=138 // pred_check
          %p824 = pneg %p157
        $region141: #{xy_loss_forward.2} parent=138 // pred_check_branch
          %826 = sbr.rel (%p824) target = $region143
        $region142: #{xy_loss_forward.2} parent=138 // pred_region
          %s827 = sand.u32 %s142, 1
          %s828 = sand.u32 %s142, 1
          %s829 = smul.addr %s828, 16
          %s830 = scalar_lea.vmem [#allocation6], %s829
        $region143: #{xy_loss_forward.2} parent=138 // pred_fallthru
          _
        // Predicated region
        $region144: #{xy_loss_forward.2} parent=138 // pred_check
          %p831 = pneg %p183
        $region145: #{xy_loss_forward.2} parent=138 // pred_check_branch
          %833 = sbr.rel (%p831) target = $region147
        $region146: #{xy_loss_forward.2} parent=138 // pred_region
          %s834 = smul.u32 2, %s26
          %p835 = scmp.lt.s32.totalorder %s834, 3
          %s836 = scalar_select %p835, %s834, 3
          %s837 = smul.addr %s836, 8
          %s838 = scalar_lea.vmem %s5, %s837
        $region147: #{xy_loss_forward.2} parent=138 // pred_fallthru
          _
        // Predicated region
        $region148: #{xy_loss_forward.2} parent=138 // pred_check
          %p839 = pneg %p209
        $region149: #{xy_loss_forward.2} parent=138 // pred_check_branch
          %841 = sbr.rel (%p839) target = $region151
        $region150: #{xy_loss_forward.2} parent=138 // pred_region
          %s842 = smul.u32 2, %s26
          %p843 = scmp.lt.s32.totalorder %s842, 3
          %s844 = scalar_select %p843, %s842, 3
          %s845 = smul.addr %s844, 8
          %s846 = scalar_lea.vmem %s6, %s845
        $region151: #{xy_loss_forward.2} parent=138 // pred_fallthru
          _
        // Predicated region
        $region152: #{xy_loss_forward.2} parent=138 // pred_check
          %p847 = pneg %p235
        $region153: #{xy_loss_forward.2} parent=138 // pred_check_branch
          %849 = sbr.rel (%p847) target = $region155
        $region154: #{xy_loss_forward.2} parent=138 // pred_region
          %s850 = smul.u32 2, %s26
          %p851 = scmp.lt.s32.totalorder %s850, 3
          %s852 = scalar_select %p851, %s850, 3
          %s853 = smul.addr %s852, 8
          %s854 = scalar_lea.vmem %s7, %s853
        $region155: #{xy_loss_forward.2} parent=138 // pred_fallthru
          _
      $region139: #{xy_loss_forward.2} parent=5 // pred_fallthru
        _
    $region6: #{xy_loss_forward.2} parent=1 // loop_footer
      %s19 = sadd.s32 1, %s15
    $region7: #{xy_loss_forward.2} parent=1 // loop_footer_branch
      %14 = sbr.rel target = $region3
    $region8: #{xy_loss_forward.2} parent=1 // loop_exit
      _
    %855 = vsyncpa [#allocation4], 1
    %s856 = scalar_lea.sflag [#allocation4], 1
    %857 = vsyncpa %s856, 1

</llo_original>
